<compile_context>
chip_gen: v7x
topology: tpu7x:2x2x1
jax: 0.10.0
libtpu: 0.0.40
codegen_flags: <defaults>
</compile_context>

<pallas_src>
import functools

import jax
import jax.numpy as jnp
from jax import lax
from jax.experimental import pallas as pl
from jax.experimental.pallas import tpu as pltpu

H1, H2, H3, H4 = 1024, 512, 128, 1


def _value_net_kernel(x_ref,
                      w1_ref, b1_ref,
                      w2_ref, b2_ref,
                      w3_ref, b3_ref,
                      w4_ref, b4_ref,
                      out_ref):
    # fc1 + ReLU: f32 MXU inputs (keeps raw state features un-quantized),
    # bf16 epilogue (bias add + ReLU on the VPU).
    h = jnp.dot(x_ref[...], w1_ref[...], preferred_element_type=jnp.float32)
    h = jnp.maximum(h.astype(jnp.bfloat16) + b1_ref[...], 0)        # [TB,1024] bf16

    # fc2 + ReLU: bf16 MXU inputs, f32 accumulation, bf16 epilogue.
    h = jnp.dot(h, w2_ref[...], preferred_element_type=jnp.float32)
    h = jnp.maximum(h.astype(jnp.bfloat16) + b2_ref[...], 0)        # [TB,512] bf16

    # fc3 + ReLU: keep the f32 MXU result (feeds the f32 scalar head).
    h = jnp.dot(h, w3_ref[...], preferred_element_type=jnp.float32)
    h = jnp.maximum(h + b3_ref[...], 0.0)                           # [TB,128] f32

    # fc4 (single output unit): contract the 128-lane axis of h against the
    # w4 row ("NT" dot_general) -> lane-dense [1, TB] row directly, so the
    # store is an unmasked full-lane vst (no [TB,1] column ever materializes).
    v = lax.dot_general(w4_ref[...], h, (((1,), (1,)), ((), ())),
                        preferred_element_type=jnp.float32)         # [1, TB] f32
    out_ref[...] = (v + b4_ref[...]).astype(out_ref.dtype)


def _pick_batch_tile(batch, max_tile):
    """Pick (tb, b_pad) minimizing padded rows.

    Single tile: pad B to a multiple of 8 (block dims then equal the array
    dims, so any size is legal).  Multi-tile: tb must be a multiple of 128 so
    the lane-dense (1, tb) output block is aligned; pick the candidate with
    the least padding (ties -> larger tile, amortizes per-step overhead).
    """
    b8 = pl.cdiv(batch, 8) * 8
    if b8 <= max_tile:
        return b8, b8
    candidates = [c for c in (512, 384, 256, 128) if c <= max_tile] or [128]
    tb = min(candidates, key=lambda c: (pl.cdiv(batch, c) * c, -c))
    return tb, pl.cdiv(batch, tb) * tb


@functools.partial(jax.jit, static_argnames=("max_tile",))
def value_net_forward(x, params, *, max_tile=512):
    """x: [B, state_dim] float32 -> [B, 1] float32."""
    (w1, b1), (w2, b2), (w3, b3), (w4, b4) = params
    B, D = x.shape

    tb, b_pad = _pick_batch_tile(B, max_tile)
    xb = x if b_pad == B else jnp.pad(x, ((0, b_pad - B), (0, 0)))

    grid = (b_pad // tb,)
    resident = lambda i: (0, 0)        # weights/biases: same block every step

    out = pl.pallas_call(
        _value_net_kernel,
        out_shape=jax.ShapeDtypeStruct((1, b_pad), jnp.float32),   # lane-dense
        grid=grid,
        in_specs=[
            pl.BlockSpec((tb, D), lambda i: (i, 0)),   # x tile (double-buffered)
            pl.BlockSpec(w1.shape, resident),
            pl.BlockSpec(b1.shape, resident),
            pl.BlockSpec(w2.shape, resident),
            pl.BlockSpec(b2.shape, resident),
            pl.BlockSpec(w3.shape, resident),
            pl.BlockSpec(b3.shape, resident),
            pl.BlockSpec(w4.shape, resident),
            pl.BlockSpec(b4.shape, resident),
        ],
        out_specs=pl.BlockSpec((1, tb), lambda i: (0, i)),
        compiler_params=pltpu.CompilerParams(
            # Batch tiles are independent -> shard across TensorCores on v7x.
            dimension_semantics=("parallel",),
        ),
    )(xb, w1, b1, w2, b2, w3, b3, w4, b4)

    return out.reshape(b_pad, 1)[:B]


def init_params(key, state_dim):
    """PyTorch-Linear-style init, laid out for the kernel.

    fc1: W (state_dim, 1024) f32, b (1, 1024) bf16
    fc2: W (1024, 512)  bf16, b (1, 512) bf16
    fc3: W (512, 128)   bf16, b (1, 128) f32
    fc4: W as a (1, 128) f32 row, b (1, 1) f32
    """
    dims = [(state_dim, H1), (H1, H2), (H2, H3), (H3, H4)]
    params = []
    for i, (din, dout) in enumerate(dims):
        kw, kb = jax.random.split(jax.random.fold_in(key, i))
        bound = 1.0 / float(din) ** 0.5          # PyTorch default uniform bound
        w = jax.random.uniform(kw, (din, dout), jnp.float32, -bound, bound)
        b = jax.random.uniform(kb, (1, dout), jnp.float32, -bound, bound)
        if i == 0:
            params.append((w, b.astype(jnp.bfloat16)))
        elif i == 1:
            params.append((w.astype(jnp.bfloat16), b.astype(jnp.bfloat16)))
        elif i == 2:
            params.append((w.astype(jnp.bfloat16), b))
        else:
            params.append((w.T, b))               # (1, 128) row, (1, 1)
    return params


def value_net_ref(x, params):
    """Pure-JAX reference mirroring the kernel's dtype flow."""
    (w1, b1), (w2, b2), (w3, b3), (w4, b4) = params
    h = jnp.dot(x, w1, preferred_element_type=jnp.float32)
    h = jnp.maximum(h.astype(jnp.bfloat16) + b1, 0)
    h = jnp.dot(h, w2, preferred_element_type=jnp.float32)
    h = jnp.maximum(h.astype(jnp.bfloat16) + b2, 0)
    h = jnp.dot(h, w3, preferred_element_type=jnp.float32)
    h = jnp.maximum(h + b3, 0.0)
    return jnp.sum(h * w4, axis=-1, keepdims=True) + b4


if __name__ == "__main__":
    key = jax.random.PRNGKey(0)
    B, STATE_DIM = 8, 32   # small shapes consistent with the module

    kx, kp = jax.random.split(key)
    x = jax.random.normal(kx, (B, STATE_DIM), jnp.float32)
    params = init_params(kp, STATE_DIM)

    out = jax.block_until_ready(value_net_forward(x, params))
    ref = value_net_ref(x, params)

    assert out.shape == (B, 1)
    assert jnp.allclose(out, ref, atol=5e-3, rtol=5e-3), "mismatch vs reference"

    print("KERNEL_OK")
</pallas_src>

<mosaic_0001>
module attributes {stable_mosaic.version = 11 : i64} {
  func.func @_value_net_kernel(%arg0: i32, %arg1: memref<8x32xf32, #tpu.memory_space<vmem>>, %arg2: memref<32x1024xf32, #tpu.memory_space<vmem>>, %arg3: memref<1x1024xbf16, #tpu.memory_space<vmem>>, %arg4: memref<1024x512xbf16, #tpu.memory_space<vmem>>, %arg5: memref<1x512xbf16, #tpu.memory_space<vmem>>, %arg6: memref<512x128xbf16, #tpu.memory_space<vmem>>, %arg7: memref<1x128xf32, #tpu.memory_space<vmem>>, %arg8: memref<1x128xf32, #tpu.memory_space<vmem>>, %arg9: memref<1x1xf32, #tpu.memory_space<vmem>>, %arg10: memref<1x8xf32, #tpu.memory_space<vmem>>) attributes {dimension_semantics = [#tpu.dimension_semantics<parallel>], iteration_bounds = array<i64: 1>, scalar_prefetch = 0 : i64, scratch_operands = 0 : i64, tpu.core_type = #tpu.core_type<tc>, window_params = [{transform_indices = @transform_0, window_bounds = array<i64: 8, 32>}, {pipeline_mode = #tpu.pipeline_mode<synchronous>, transform_indices = @transform_1, window_bounds = array<i64: 32, 1024>}, {pipeline_mode = #tpu.pipeline_mode<synchronous>, transform_indices = @transform_2, window_bounds = array<i64: 1, 1024>}, {pipeline_mode = #tpu.pipeline_mode<synchronous>, transform_indices = @transform_3, window_bounds = array<i64: 1024, 512>}, {pipeline_mode = #tpu.pipeline_mode<synchronous>, transform_indices = @transform_4, window_bounds = array<i64: 1, 512>}, {pipeline_mode = #tpu.pipeline_mode<synchronous>, transform_indices = @transform_5, window_bounds = array<i64: 512, 128>}, {pipeline_mode = #tpu.pipeline_mode<synchronous>, transform_indices = @transform_6, window_bounds = array<i64: 1, 128>}, {pipeline_mode = #tpu.pipeline_mode<synchronous>, transform_indices = @transform_7, window_bounds = array<i64: 1, 128>}, {pipeline_mode = #tpu.pipeline_mode<synchronous>, transform_indices = @transform_8, window_bounds = array<i64: 1, 1>}, {transform_indices = @transform_9, window_bounds = array<i64: 1, 8>}]} {
    %c0 = arith.constant 0 : index
    %c0_0 = arith.constant 0 : index
    %0 = vector.load %arg1[%c0, %c0_0] : memref<8x32xf32, #tpu.memory_space<vmem>>, vector<8x32xf32>
    %c0_1 = arith.constant 0 : index
    %c0_2 = arith.constant 0 : index
    %1 = vector.load %arg2[%c0_1, %c0_2] : memref<32x1024xf32, #tpu.memory_space<vmem>>, vector<32x1024xf32>
    %cst = arith.constant dense<0.000000e+00> : vector<8x1024xf32>
    %2 = tpu.matmul %0, %1, %cst {dimension_numbers = #tpu.dot_dimension_numbers<[1], [0], [0], [1], [0, 0, 1, 1], [], []>} : vector<8x32xf32>, vector<32x1024xf32>, vector<8x1024xf32> -> vector<8x1024xf32>
    %3 = arith.truncf %2 : vector<8x1024xf32> to vector<8x1024xbf16>
    %c0_3 = arith.constant 0 : index
    %c0_4 = arith.constant 0 : index
    %4 = vector.load %arg3[%c0_3, %c0_4] : memref<1x1024xbf16, #tpu.memory_space<vmem>>, vector<1x1024xbf16>
    %5 = vector.broadcast %4 : vector<1x1024xbf16> to vector<8x1024xbf16>
    %6 = arith.addf %3, %5 : vector<8x1024xbf16>
    %cst_5 = arith.constant 0.000000e+00 : bf16
    %7 = vector.broadcast %cst_5 : bf16 to vector<8x1024xbf16>
    %8 = arith.maximumf %6, %7 : vector<8x1024xbf16>
    %c0_6 = arith.constant 0 : index
    %c0_7 = arith.constant 0 : index
    %9 = vector.load %arg4[%c0_6, %c0_7] : memref<1024x512xbf16, #tpu.memory_space<vmem>>, vector<1024x512xbf16>
    %cst_8 = arith.constant dense<0.000000e+00> : vector<8x512xf32>
    %10 = tpu.matmul %8, %9, %cst_8 {dimension_numbers = #tpu.dot_dimension_numbers<[1], [0], [0], [1], [0, 0, 1, 1], [], []>} : vector<8x1024xbf16>, vector<1024x512xbf16>, vector<8x512xf32> -> vector<8x512xf32>
    %11 = arith.truncf %10 : vector<8x512xf32> to vector<8x512xbf16>
    %c0_9 = arith.constant 0 : index
    %c0_10 = arith.constant 0 : index
    %12 = vector.load %arg5[%c0_9, %c0_10] : memref<1x512xbf16, #tpu.memory_space<vmem>>, vector<1x512xbf16>
    %13 = vector.broadcast %12 : vector<1x512xbf16> to vector<8x512xbf16>
    %14 = arith.addf %11, %13 : vector<8x512xbf16>
    %cst_11 = arith.constant 0.000000e+00 : bf16
    %15 = vector.broadcast %cst_11 : bf16 to vector<8x512xbf16>
    %16 = arith.maximumf %14, %15 : vector<8x512xbf16>
    %c0_12 = arith.constant 0 : index
    %c0_13 = arith.constant 0 : index
    %17 = vector.load %arg6[%c0_12, %c0_13] : memref<512x128xbf16, #tpu.memory_space<vmem>>, vector<512x128xbf16>
    %cst_14 = arith.constant dense<0.000000e+00> : vector<8x128xf32>
    %18 = tpu.matmul %16, %17, %cst_14 {dimension_numbers = #tpu.dot_dimension_numbers<[1], [0], [0], [1], [0, 0, 1, 1], [], []>} : vector<8x512xbf16>, vector<512x128xbf16>, vector<8x128xf32> -> vector<8x128xf32>
    %c0_15 = arith.constant 0 : index
    %c0_16 = arith.constant 0 : index
    %19 = vector.load %arg7[%c0_15, %c0_16] : memref<1x128xf32, #tpu.memory_space<vmem>>, vector<1x128xf32>
    %20 = vector.broadcast %19 : vector<1x128xf32> to vector<8x128xf32>
    %21 = arith.addf %18, %20 : vector<8x128xf32>
    %cst_17 = arith.constant 0.000000e+00 : f32
    %22 = vector.broadcast %cst_17 : f32 to vector<8x128xf32>
    %23 = arith.maximumf %21, %22 : vector<8x128xf32>
    %c0_18 = arith.constant 0 : index
    %c0_19 = arith.constant 0 : index
    %24 = vector.load %arg8[%c0_18, %c0_19] : memref<1x128xf32, #tpu.memory_space<vmem>>, vector<1x128xf32>
    %cst_20 = arith.constant dense<0.000000e+00> : vector<1x8xf32>
    %25 = tpu.matmul %24, %23, %cst_20 {dimension_numbers = #tpu.dot_dimension_numbers<[1], [1], [0], [0], [0, 0, 1, 0], [], []>} : vector<1x128xf32>, vector<8x128xf32>, vector<1x8xf32> -> vector<1x8xf32>
    %c0_21 = arith.constant 0 : index
    %c0_22 = arith.constant 0 : index
    %26 = vector.load %arg9[%c0_21, %c0_22] : memref<1x1xf32, #tpu.memory_space<vmem>>, vector<1x1xf32>
    %27 = vector.broadcast %26 : vector<1x1xf32> to vector<1x8xf32>
    %28 = arith.addf %25, %27 : vector<1x8xf32>
    %c0_23 = arith.constant 0 : index
    %c0_24 = arith.constant 0 : index
    %29 = vector.load %arg10[%c0_23, %c0_24] : memref<1x8xf32, #tpu.memory_space<vmem>>, vector<1x8xf32>
    tpu.vector_store %arg10[%c0_23, %c0_24], %28 {strides = array<i32>} : memref<1x8xf32, #tpu.memory_space<vmem>>, vector<1x8xf32>,
    return
  }
  func.func @transform_0(%arg0: i32) -> (i32, i32) {
    %c0_i32 = arith.constant 0 : i32
    %c0_i32_0 = arith.constant 0 : i32
    return %arg0, %c0_i32 : i32, i32
  }
  func.func @transform_1(%arg0: i32) -> (i32, i32) {
    %c0_i32 = arith.constant 0 : i32
    %c0_i32_0 = arith.constant 0 : i32
    %c0_i32_1 = arith.constant 0 : i32
    return %c0_i32, %c0_i32_0 : i32, i32
  }
  func.func @transform_2(%arg0: i32) -> (i32, i32) {
    %c0_i32 = arith.constant 0 : i32
    %c0_i32_0 = arith.constant 0 : i32
    %c0_i32_1 = arith.constant 0 : i32
    return %c0_i32, %c0_i32_0 : i32, i32
  }
  func.func @transform_3(%arg0: i32) -> (i32, i32) {
    %c0_i32 = arith.constant 0 : i32
    %c0_i32_0 = arith.constant 0 : i32
    %c0_i32_1 = arith.constant 0 : i32
    return %c0_i32, %c0_i32_0 : i32, i32
  }
  func.func @transform_4(%arg0: i32) -> (i32, i32) {
    %c0_i32 = arith.constant 0 : i32
    %c0_i32_0 = arith.constant 0 : i32
    %c0_i32_1 = arith.constant 0 : i32
    return %c0_i32, %c0_i32_0 : i32, i32
  }
  func.func @transform_5(%arg0: i32) -> (i32, i32) {
    %c0_i32 = arith.constant 0 : i32
    %c0_i32_0 = arith.constant 0 : i32
    %c0_i32_1 = arith.constant 0 : i32
    return %c0_i32, %c0_i32_0 : i32, i32
  }
  func.func @transform_6(%arg0: i32) -> (i32, i32) {
    %c0_i32 = arith.constant 0 : i32
    %c0_i32_0 = arith.constant 0 : i32
    %c0_i32_1 = arith.constant 0 : i32
    return %c0_i32, %c0_i32_0 : i32, i32
  }
  func.func @transform_7(%arg0: i32) -> (i32, i32) {
    %c0_i32 = arith.constant 0 : i32
    %c0_i32_0 = arith.constant 0 : i32
    %c0_i32_1 = arith.constant 0 : i32
    return %c0_i32, %c0_i32_0 : i32, i32
  }
  func.func @transform_8(%arg0: i32) -> (i32, i32) {
    %c0_i32 = arith.constant 0 : i32
    %c0_i32_0 = arith.constant 0 : i32
    %c0_i32_1 = arith.constant 0 : i32
    return %c0_i32, %c0_i32_0 : i32, i32
  }
  func.func @transform_9(%arg0: i32) -> (i32, i32) {
    %c0_i32 = arith.constant 0 : i32
    %c0_i32_0 = arith.constant 0 : i32
    return %c0_i32, %arg0 : i32, i32
  }
}

</mosaic_0001>

<llo_original>
// kernel: value_net_forward.1
$region0: #{value_net_forward.1}
  #allocation0 [shape = 'u32[]', space=smem, size = 0x4, offset = 0x4, fixed_abs, tag = 'smem constant byte address 0x4 - core index']
  #allocation1 [shape = 'u32[144,128]{1,0:T(1,128)}', space=vmem, size = 0x12000, scoped, tag = 'internal scratch']
  #allocation2 [shape = 'f32[1,1]{1,0:T(1,128)S(1)}', space=vmem, size = 0x200, scoped, tag = 'scoped memory for value_net_forward.1']
  %s0 = inlined_call_operand.hbm [shape: f32[8,32], index: 0, kind: input, shape index: {}]
  %s1 = inlined_call_operand.hbm [shape: f32[32,1024], index: 1, kind: input, shape index: {}]
  %s2 = inlined_call_operand.vmem [shape: bf16[1,1024], index: 2, kind: input, shape index: {}]
  %s3 = inlined_call_operand.hbm [shape: bf16[1024,512], index: 3, kind: input, shape index: {}]
  %s4 = inlined_call_operand.vmem [shape: bf16[1,512], index: 4, kind: input, shape index: {}]
  %s5 = inlined_call_operand.hbm [shape: bf16[512,128], index: 5, kind: input, shape index: {}]
  %s6 = inlined_call_operand.vmem [shape: f32[1,128], index: 6, kind: input, shape index: {}]
  %s7 = inlined_call_operand.vmem [shape: f32[1,128], index: 7, kind: input, shape index: {}]
  %s8 = inlined_call_operand.<no memory space> [shape: f32[1,1], index: 8, kind: input, shape index: {}]
  %s9 = inlined_call_operand.hbm [shape: f32[1,8], index: 9, kind: output, shape index: {}]
  %s10 = sld [smem:[#allocation0]]
  $region62: #{value_net_forward.1} parent=0
    _
  %s12 = ssub.s32 1, %s10
  %s13 = scalar_select 0, %s12, %s10
  %v14 = vstv %s8
  %15 = vst [vmem:[#allocation2] sm:$0x1] %v14
  $region1: #{value_net_forward.1} parent=0
    #allocation3 [shape = 'u8[4096]{0}', space=vmem, size = 0x1000, scoped, tag = 'input window, operand 0, single buffered']
    #allocation4 [shape = 's32[1]{0}', space=sflag, size = 0x4, scoped, tag = 'scoped memory for value_net_forward.1']
    #allocation5 [shape = 's32[1]{0}', space=sflag, size = 0x4, scoped, tag = 'scoped memory for value_net_forward.1']
    #allocation6 [shape = 'u8[131072]{0}', space=vmem, size = 0x20000, scoped, tag = 'input window, operand 1, single buffered']
    #allocation7 [shape = 's32[1]{0}', space=sflag, size = 0x4, scoped, tag = 'scoped memory for value_net_forward.1']
    #allocation8 [shape = 'u8[1048576]{0}', space=vmem, size = 0x100000, scoped, tag = 'input window, operand 3, single buffered']
    #allocation9 [shape = 'u8[131072]{0}', space=vmem, size = 0x20000, scoped, tag = 'input window, operand 5, single buffered']
    #allocation10 [shape = 's32[1]{0}', space=sflag, size = 0x4, scoped, tag = 'scoped memory for value_net_forward.1']
    #allocation11 [shape = 'u8[512]{0}', space=vmem, size = 0x400, scoped, tag = 'output window, operand 0, single buffered']
    %16 = vsyncpa [#allocation4], 0
    %17 = vsyncpa [#allocation7], 0
    %18 = vsyncpa [#allocation10], 0
    %19 = vsyncpa [#allocation5], 0
    // Predicated region
    $region2: #{value_net_forward.1} parent=1 // pred_check
      _
    $region3: #{value_net_forward.1} parent=1 // pred_check_branch
      %21 = sbr.rel (0) target = $region5
    $region4: #{value_net_forward.1} parent=1 // pred_region
      %s23 = ssub.s32 128, 128
      %24 = vsyncadd [#allocation4], %s23
      %s26 = sshll.u32 [#allocation3], 4
      %s27 = int_to_ptr.vmem [resolvable:$true] %s26
      %29 = dma.hbm_to_vmem [thread:$0]  %s0, 128, %s27, [#allocation4]
    $region5: #{value_net_forward.1} parent=1 // pred_fallthru
      _
    // Predicated region
    $region6: #{value_net_forward.1} parent=1 // pred_check
      _
    $region7: #{value_net_forward.1} parent=1 // pred_check_branch
      %31 = sbr.rel (0) target = $region9
    $region8: #{value_net_forward.1} parent=1 // pred_region
      %s33 = ssub.s32 4096, 4096
      %34 = vsyncadd [#allocation7], %s33
      %s35 = sshll.u32 [#allocation6], 4
      %s36 = int_to_ptr.vmem [resolvable:$true] %s35
      %41 = dma.hbm_to_vmem [thread:$0]  %s1, 4096, %s36, [#allocation7], 1024, 1024, 64
    $region9: #{value_net_forward.1} parent=1 // pred_fallthru
      _
    // Predicated region
    $region10: #{value_net_forward.1} parent=1 // pred_check
      _
    $region11: #{value_net_forward.1} parent=1 // pred_check_branch
      %43 = sbr.rel (0) target = $region13
    $region12: #{value_net_forward.1} parent=1 // pred_region
      _
    $region13: #{value_net_forward.1} parent=1 // pred_fallthru
      _
    // Predicated region
    $region14: #{value_net_forward.1} parent=1 // pred_check
      _
    $region15: #{value_net_forward.1} parent=1 // pred_check_branch
      %45 = sbr.rel (0) target = $region17
    $region16: #{value_net_forward.1} parent=1 // pred_region
      %s47 = ssub.s32 32768, 32768
      %48 = vsyncadd [#allocation7], %s47
      %s49 = sshll.u32 [#allocation8], 4
      %s50 = int_to_ptr.vmem [resolvable:$true] %s49
      %55 = dma.hbm_to_vmem [thread:$0]  %s3, 32768, %s50, [#allocation7], 256, 256, 16
    $region17: #{value_net_forward.1} parent=1 // pred_fallthru
      _
    // Predicated region
    $region18: #{value_net_forward.1} parent=1 // pred_check
      _
    $region19: #{value_net_forward.1} parent=1 // pred_check_branch
      %57 = sbr.rel (0) target = $region21
    $region20: #{value_net_forward.1} parent=1 // pred_region
      _
    $region21: #{value_net_forward.1} parent=1 // pred_fallthru
      _
    // Predicated region
    $region22: #{value_net_forward.1} parent=1 // pred_check
      _
    $region23: #{value_net_forward.1} parent=1 // pred_check_branch
      %59 = sbr.rel (0) target = $region25
    $region24: #{value_net_forward.1} parent=1 // pred_region
      %s61 = ssub.s32 4096, 4096
      %62 = vsyncadd [#allocation10], %s61
      %s63 = sshll.u32 [#allocation9], 4
      %s64 = int_to_ptr.vmem [resolvable:$true] %s63
      %69 = dma.hbm_to_vmem [thread:$0]  %s5, 4096, %s64, [#allocation10], 64, 64, 4
    $region25: #{value_net_forward.1} parent=1 // pred_fallthru
      _
    // Predicated region
    $region26: #{value_net_forward.1} parent=1 // pred_check
      _
    $region27: #{value_net_forward.1} parent=1 // pred_check_branch
      %71 = sbr.rel (0) target = $region29
    $region28: #{value_net_forward.1} parent=1 // pred_region
      _
    $region29: #{value_net_forward.1} parent=1 // pred_fallthru
      _
    // Predicated region
    $region30: #{value_net_forward.1} parent=1 // pred_check
      _
    $region31: #{value_net_forward.1} parent=1 // pred_check_branch
      %73 = sbr.rel (0) target = $region33
    $region32: #{value_net_forward.1} parent=1 // pred_region
      _
    $region33: #{value_net_forward.1} parent=1 // pred_fallthru
      _
    // Predicated region
    $region34: #{value_net_forward.1} parent=1 // pred_check
      _
    $region35: #{value_net_forward.1} parent=1 // pred_check_branch
      %75 = sbr.rel (0) target = $region37
    $region36: #{value_net_forward.1} parent=1 // pred_region
      _
    $region37: #{value_net_forward.1} parent=1 // pred_fallthru
      _
    // Predicated region
    $region38: #{value_net_forward.1} parent=1 // pred_check
      _
    $region39: #{value_net_forward.1} parent=1 // pred_check_branch
      %77 = sbr.rel (0) target = $region41
    $region40: #{value_net_forward.1} parent=1 // pred_region
      %78 = dma.done [#allocation4], 128
    $region41: #{value_net_forward.1} parent=1 // pred_fallthru
      _
    // Predicated region
    $region42: #{value_net_forward.1} parent=1 // pred_check
      _
    $region43: #{value_net_forward.1} parent=1 // pred_check_branch
      %80 = sbr.rel (0) target = $region45
    $region44: #{value_net_forward.1} parent=1 // pred_region
      %81 = dma.done [#allocation7], 4096
    $region45: #{value_net_forward.1} parent=1 // pred_fallthru
      _
    // Predicated region
    $region46: #{value_net_forward.1} parent=1 // pred_check
      _
    $region47: #{value_net_forward.1} parent=1 // pred_check_branch
      %83 = sbr.rel (0) target = $region49
    $region48: #{value_net_forward.1} parent=1 // pred_region
      %84 = dma.done [#allocation7], 32768
    $region49: #{value_net_forward.1} parent=1 // pred_fallthru
      _
    // Predicated region
    $region50: #{value_net_forward.1} parent=1 // pred_check
      _
    $region51: #{value_net_forward.1} parent=1 // pred_check_branch
      %86 = sbr.rel (0) target = $region53
    $region52: #{value_net_forward.1} parent=1 // pred_region
      %87 = dma.done [#allocation10], 4096
    $region53: #{value_net_forward.1} parent=1 // pred_fallthru
      _
    %v89 = vld [vmem:[#allocation3] sm:$0xff]
    %v90 = vld [vmem:[#allocation6] sm:$0xff]
    %v91 = vld [vmem:[#allocation6 + $0x8] sm:$0xff]
    %v92 = vld [vmem:[#allocation6 + $0x10] sm:$0xff]
    %v93 = vld [vmem:[#allocation6 + $0x18] sm:$0xff]
    %v94 = vld [vmem:[#allocation6 + $0x20] sm:$0xff]
    %v95 = vld [vmem:[#allocation6 + $0x28] sm:$0xff]
    %v96 = vld [vmem:[#allocation6 + $0x30] sm:$0xff]
    %v97 = vld [vmem:[#allocation6 + $0x38] sm:$0xff]
    %v98 = vld [vmem:[#allocation6 + $0x40] sm:$0xff]
    %v99 = vld [vmem:[#allocation6 + $0x48] sm:$0xff]
    %v100 = vld [vmem:[#allocation6 + $0x50] sm:$0xff]
    %v101 = vld [vmem:[#allocation6 + $0x58] sm:$0xff]
    %v102 = vld [vmem:[#allocation6 + $0x60] sm:$0xff]
    %v103 = vld [vmem:[#allocation6 + $0x68] sm:$0xff]
    %v104 = vld [vmem:[#allocation6 + $0x70] sm:$0xff]
    %v105 = vld [vmem:[#allocation6 + $0x78] sm:$0xff]
    %v106 = vld [vmem:[#allocation6 + $0x80] sm:$0xff]
    %v107 = vld [vmem:[#allocation6 + $0x88] sm:$0xff]
    %v108 = vld [vmem:[#allocation6 + $0x90] sm:$0xff]
    %v109 = vld [vmem:[#allocation6 + $0x98] sm:$0xff]
    %v110 = vld [vmem:[#allocation6 + $0xa0] sm:$0xff]
    %v111 = vld [vmem:[#allocation6 + $0xa8] sm:$0xff]
    %v112 = vld [vmem:[#allocation6 + $0xb0] sm:$0xff]
    %v113 = vld [vmem:[#allocation6 + $0xb8] sm:$0xff]
    %v114 = vld [vmem:[#allocation6 + $0xc0] sm:$0xff]
    %v115 = vld [vmem:[#allocation6 + $0xc8] sm:$0xff]
    %v116 = vld [vmem:[#allocation6 + $0xd0] sm:$0xff]
    %v117 = vld [vmem:[#allocation6 + $0xd8] sm:$0xff]
    %v118 = vld [vmem:[#allocation6 + $0xe0] sm:$0xff]
    %v119 = vld [vmem:[#allocation6 + $0xe8] sm:$0xff]
    %v120 = vld [vmem:[#allocation6 + $0xf0] sm:$0xff]
    %v121 = vld [vmem:[#allocation6 + $0xf8] sm:$0xff]
    %vm122 = vcmask 261120
    %v124 = vsel %vm122, %v89, 0
    %126 = vmatprep.subr.mxu0 %v91
    %127 = vmatpush1.msra.mxu0 %v90
    %128 = vmatprep.subr.mxu0 %v99
    %129 = vmatpush1.msra.mxu0 %v98
    %130 = vmatprep.subr.mxu0 %v107
    %131 = vmatpush1.msra.mxu0 %v106
    %132 = vmatprep.subr.mxu0 %v115
    %133 = vmatpush1.msra.mxu0 %v114
    %134 = vmatprep.subr.mxu0 0.0
    %135 = vmatpush1.msra.mxu0 0.0
    %136 = vmatprep.subr.mxu0 0.0
    %137 = vmatpush1.msra.mxu0 0.0
    %138 = vmatprep.subr.mxu0 0.0
    %139 = vmatpush1.msra.mxu0 0.0
    %140 = vmatprep.subr.mxu0 0.0
    %141 = vmatpush1.msra.mxu0 0.0
    %142 = vmatprep.subr.mxu0 0.0
    %143 = vmatpush1.msra.mxu0 0.0
    %144 = vmatprep.subr.mxu0 0.0
    %145 = vmatpush1.msra.mxu0 0.0
    %146 = vmatprep.subr.mxu0 0.0
    %147 = vmatpush1.msra.mxu0 0.0
    %148 = vmatprep.subr.mxu0 0.0
    %149 = vmatpush1.msra.mxu0 0.0
    %150 = vmatprep.subr.mxu0 0.0
    %151 = vmatpush1.msra.mxu0 0.0
    %152 = vmatprep.subr.mxu0 0.0
    %153 = vmatpush1.msra.mxu0 0.0
    %154 = vmatprep.subr.mxu0 0.0
    %155 = vmatpush1.msra.mxu0 0.0
    %156 = vmatprep.subr.mxu0 0.0
    %157 = vmatpush1.msra.mxu0 0.0
    %158 = vmatprep.subr.mxu0 0.0
    %159 = vmatpush1.msra.mxu0 0.0
    %160 = vmatprep.subr.mxu0 0.0
    %161 = vmatpush1.msra.mxu0 0.0
    %162 = vmatprep.subr.mxu0 0.0
    %163 = vmatpush1.msra.mxu0 0.0
    %164 = vmatprep.subr.mxu0 0.0
    %165 = vmatpush1.msra.mxu0 0.0
    %166 = vmatprep.subr.mxu0 0.0
    %167 = vmatpush1.msra.mxu0 0.0
    %168 = vmatprep.subr.mxu0 0.0
    %169 = vmatpush1.msra.mxu0 0.0
    %170 = vmatprep.subr.mxu0 0.0
    %171 = vmatpush1.msra.mxu0 0.0
    %172 = vmatprep.subr.mxu0 0.0
    %173 = vmatpush1.msra.mxu0 0.0
    %174 = vmatprep.subr.mxu0 0.0
    %175 = vmatpush1.msra.mxu0 0.0
    %176 = vmatprep.subr.mxu0 0.0
    %177 = vmatpush1.msra.mxu0 0.0
    %178 = vmatprep.subr.mxu0 0.0
    %179 = vmatpush1.msra.mxu0 0.0
    %180 = vmatprep.subr.mxu0 0.0
    %181 = vmatpush1.msra.mxu0 0.0
    %182 = vmatprep.subr.mxu0 0.0
    %183 = vmatpush1.msra.mxu0 0.0
    %184 = vmatprep.subr.mxu0 0.0
    %185 = vmatpush1.msra.mxu0 0.0
    %186 = vmatprep.subr.mxu0 0.0
    %187 = vmatpush1.msra.mxu0 0.0
    %188 = vmatprep.subr.mxu0 0.0
    %189 = vmatpush1.msra.mxu0 0.0
    %190 = vmatprep.mubr.f32.mxu0 0.0
    %191 = vmatmul.mubr.f32.gmra.mrb[0].mxu0 %v124
    %v192 = vpop.f32.mrb[0].mxu0
    %v193 = vadd.f32 0.0, %v192
    %v194 = vpop.f32.mrb[0].mxu0
    %v195 = vadd.f32 0.0, %v194
    %196 = vdwg.mxu0
    %197 = vmatprep.subr.mxu0 %v93
    %198 = vmatpush1.msra.mxu0 %v92
    %199 = vmatprep.subr.mxu0 %v101
    %200 = vmatpush1.msra.mxu0 %v100
    %201 = vmatprep.subr.mxu0 %v109
    %202 = vmatpush1.msra.mxu0 %v108
    %203 = vmatprep.subr.mxu0 %v117
    %204 = vmatpush1.msra.mxu0 %v116
    %205 = vmatprep.subr.mxu0 0.0
    %206 = vmatpush1.msra.mxu0 0.0
    %207 = vmatprep.subr.mxu0 0.0
    %208 = vmatpush1.msra.mxu0 0.0
    %209 = vmatprep.subr.mxu0 0.0
    %210 = vmatpush1.msra.mxu0 0.0
    %211 = vmatprep.subr.mxu0 0.0
    %212 = vmatpush1.msra.mxu0 0.0
    %213 = vmatprep.subr.mxu0 0.0
    %214 = vmatpush1.msra.mxu0 0.0
    %215 = vmatprep.subr.mxu0 0.0
    %216 = vmatpush1.msra.mxu0 0.0
    %217 = vmatprep.subr.mxu0 0.0
    %218 = vmatpush1.msra.mxu0 0.0
    %219 = vmatprep.subr.mxu0 0.0
    %220 = vmatpush1.msra.mxu0 0.0
    %221 = vmatprep.subr.mxu0 0.0
    %222 = vmatpush1.msra.mxu0 0.0
    %223 = vmatprep.subr.mxu0 0.0
    %224 = vmatpush1.msra.mxu0 0.0
    %225 = vmatprep.subr.mxu0 0.0
    %226 = vmatpush1.msra.mxu0 0.0
    %227 = vmatprep.subr.mxu0 0.0
    %228 = vmatpush1.msra.mxu0 0.0
    %229 = vmatprep.subr.mxu0 0.0
    %230 = vmatpush1.msra.mxu0 0.0
    %231 = vmatprep.subr.mxu0 0.0
    %232 = vmatpush1.msra.mxu0 0.0
    %233 = vmatprep.subr.mxu0 0.0
    %234 = vmatpush1.msra.mxu0 0.0
    %235 = vmatprep.subr.mxu0 0.0
    %236 = vmatpush1.msra.mxu0 0.0
    %237 = vmatprep.subr.mxu0 0.0
    %238 = vmatpush1.msra.mxu0 0.0
    %239 = vmatprep.subr.mxu0 0.0
    %240 = vmatpush1.msra.mxu0 0.0
    %241 = vmatprep.subr.mxu0 0.0
    %242 = vmatpush1.msra.mxu0 0.0
    %243 = vmatprep.subr.mxu0 0.0
    %244 = vmatpush1.msra.mxu0 0.0
    %245 = vmatprep.subr.mxu0 0.0
    %246 = vmatpush1.msra.mxu0 0.0
    %247 = vmatprep.subr.mxu0 0.0
    %248 = vmatpush1.msra.mxu0 0.0
    %249 = vmatprep.subr.mxu0 0.0
    %250 = vmatpush1.msra.mxu0 0.0
    %251 = vmatprep.subr.mxu0 0.0
    %252 = vmatpush1.msra.mxu0 0.0
    %253 = vmatprep.subr.mxu0 0.0
    %254 = vmatpush1.msra.mxu0 0.0
    %255 = vmatprep.subr.mxu0 0.0
    %256 = vmatpush1.msra.mxu0 0.0
    %257 = vmatprep.subr.mxu0 0.0
    %258 = vmatpush1.msra.mxu0 0.0
    %259 = vmatprep.subr.mxu0 0.0
    %260 = vmatpush1.msra.mxu0 0.0
    %261 = vmatprep.mubr.f32.mxu0 0.0
    %262 = vmatmul.mubr.f32.gmra.mrb[0].mxu0 %v124
    %v263 = vpop.f32.mrb[0].mxu0
    %v264 = vadd.f32 0.0, %v263
    %v265 = vpop.f32.mrb[0].mxu0
    %v266 = vadd.f32 0.0, %v265
    %267 = vdwg.mxu0
    %268 = vmatprep.subr.mxu0 %v95
    %269 = vmatpush1.msra.mxu0 %v94
    %270 = vmatprep.subr.mxu0 %v103
    %271 = vmatpush1.msra.mxu0 %v102
    %272 = vmatprep.subr.mxu0 %v111
    %273 = vmatpush1.msra.mxu0 %v110
    %274 = vmatprep.subr.mxu0 %v119
    %275 = vmatpush1.msra.mxu0 %v118
    %276 = vmatprep.subr.mxu0 0.0
    %277 = vmatpush1.msra.mxu0 0.0
    %278 = vmatprep.subr.mxu0 0.0
    %279 = vmatpush1.msra.mxu0 0.0
    %280 = vmatprep.subr.mxu0 0.0
    %281 = vmatpush1.msra.mxu0 0.0
    %282 = vmatprep.subr.mxu0 0.0
    %283 = vmatpush1.msra.mxu0 0.0
    %284 = vmatprep.subr.mxu0 0.0
    %285 = vmatpush1.msra.mxu0 0.0
    %286 = vmatprep.subr.mxu0 0.0
    %287 = vmatpush1.msra.mxu0 0.0
    %288 = vmatprep.subr.mxu0 0.0
    %289 = vmatpush1.msra.mxu0 0.0
    %290 = vmatprep.subr.mxu0 0.0
    %291 = vmatpush1.msra.mxu0 0.0
    %292 = vmatprep.subr.mxu0 0.0
    %293 = vmatpush1.msra.mxu0 0.0
    %294 = vmatprep.subr.mxu0 0.0
    %295 = vmatpush1.msra.mxu0 0.0
    %296 = vmatprep.subr.mxu0 0.0
    %297 = vmatpush1.msra.mxu0 0.0
    %298 = vmatprep.subr.mxu0 0.0
    %299 = vmatpush1.msra.mxu0 0.0
    %300 = vmatprep.subr.mxu0 0.0
    %301 = vmatpush1.msra.mxu0 0.0
    %302 = vmatprep.subr.mxu0 0.0
    %303 = vmatpush1.msra.mxu0 0.0
    %304 = vmatprep.subr.mxu0 0.0
    %305 = vmatpush1.msra.mxu0 0.0
    %306 = vmatprep.subr.mxu0 0.0
    %307 = vmatpush1.msra.mxu0 0.0
    %308 = vmatprep.subr.mxu0 0.0
    %309 = vmatpush1.msra.mxu0 0.0
    %310 = vmatprep.subr.mxu0 0.0
    %311 = vmatpush1.msra.mxu0 0.0
    %312 = vmatprep.subr.mxu0 0.0
    %313 = vmatpush1.msra.mxu0 0.0
    %314 = vmatprep.subr.mxu0 0.0
    %315 = vmatpush1.msra.mxu0 0.0
    %316 = vmatprep.subr.mxu0 0.0
    %317 = vmatpush1.msra.mxu0 0.0
    %318 = vmatprep.subr.mxu0 0.0
    %319 = vmatpush1.msra.mxu0 0.0
    %320 = vmatprep.subr.mxu0 0.0
    %321 = vmatpush1.msra.mxu0 0.0
    %322 = vmatprep.subr.mxu0 0.0
    %323 = vmatpush1.msra.mxu0 0.0
    %324 = vmatprep.subr.mxu0 0.0
    %325 = vmatpush1.msra.mxu0 0.0
    %326 = vmatprep.subr.mxu0 0.0
    %327 = vmatpush1.msra.mxu0 0.0
    %328 = vmatprep.subr.mxu0 0.0
    %329 = vmatpush1.msra.mxu0 0.0
    %330 = vmatprep.subr.mxu0 0.0
    %331 = vmatpush1.msra.mxu0 0.0
    %332 = vmatprep.mubr.f32.mxu0 0.0
    %333 = vmatmul.mubr.f32.gmra.mrb[0].mxu0 %v124
    %v334 = vpop.f32.mrb[0].mxu0
    %v335 = vadd.f32 0.0, %v334
    %v336 = vpop.f32.mrb[0].mxu0
    %v337 = vadd.f32 0.0, %v336
    %338 = vdwg.mxu0
    %339 = vmatprep.subr.mxu0 %v97
    %340 = vmatpush1.msra.mxu0 %v96
    %341 = vmatprep.subr.mxu0 %v105
    %342 = vmatpush1.msra.mxu0 %v104
    %343 = vmatprep.subr.mxu0 %v113
    %344 = vmatpush1.msra.mxu0 %v112
    %345 = vmatprep.subr.mxu0 %v121
    %346 = vmatpush1.msra.mxu0 %v120
    %347 = vmatprep.subr.mxu0 0.0
    %348 = vmatpush1.msra.mxu0 0.0
    %349 = vmatprep.subr.mxu0 0.0
    %350 = vmatpush1.msra.mxu0 0.0
    %351 = vmatprep.subr.mxu0 0.0
    %352 = vmatpush1.msra.mxu0 0.0
    %353 = vmatprep.subr.mxu0 0.0
    %354 = vmatpush1.msra.mxu0 0.0
    %355 = vmatprep.subr.mxu0 0.0
    %356 = vmatpush1.msra.mxu0 0.0
    %357 = vmatprep.subr.mxu0 0.0
    %358 = vmatpush1.msra.mxu0 0.0
    %359 = vmatprep.subr.mxu0 0.0
    %360 = vmatpush1.msra.mxu0 0.0
    %361 = vmatprep.subr.mxu0 0.0
    %362 = vmatpush1.msra.mxu0 0.0
    %363 = vmatprep.subr.mxu0 0.0
    %364 = vmatpush1.msra.mxu0 0.0
    %365 = vmatprep.subr.mxu0 0.0
    %366 = vmatpush1.msra.mxu0 0.0
    %367 = vmatprep.subr.mxu0 0.0
    %368 = vmatpush1.msra.mxu0 0.0
    %369 = vmatprep.subr.mxu0 0.0
    %370 = vmatpush1.msra.mxu0 0.0
    %371 = vmatprep.subr.mxu0 0.0
    %372 = vmatpush1.msra.mxu0 0.0
    %373 = vmatprep.subr.mxu0 0.0
    %374 = vmatpush1.msra.mxu0 0.0
    %375 = vmatprep.subr.mxu0 0.0
    %376 = vmatpush1.msra.mxu0 0.0
    %377 = vmatprep.subr.mxu0 0.0
    %378 = vmatpush1.msra.mxu0 0.0
    %379 = vmatprep.subr.mxu0 0.0
    %380 = vmatpush1.msra.mxu0 0.0
    %381 = vmatprep.subr.mxu0 0.0
    %382 = vmatpush1.msra.mxu0 0.0
    %383 = vmatprep.subr.mxu0 0.0
    %384 = vmatpush1.msra.mxu0 0.0
    %385 = vmatprep.subr.mxu0 0.0
    %386 = vmatpush1.msra.mxu0 0.0
    %387 = vmatprep.subr.mxu0 0.0
    %388 = vmatpush1.msra.mxu0 0.0
    %389 = vmatprep.subr.mxu0 0.0
    %390 = vmatpush1.msra.mxu0 0.0
    %391 = vmatprep.subr.mxu0 0.0
    %392 = vmatpush1.msra.mxu0 0.0
    %393 = vmatprep.subr.mxu0 0.0
    %394 = vmatpush1.msra.mxu0 0.0
    %395 = vmatprep.subr.mxu0 0.0
    %396 = vmatpush1.msra.mxu0 0.0
    %397 = vmatprep.subr.mxu0 0.0
    %398 = vmatpush1.msra.mxu0 0.0
    %399 = vmatprep.subr.mxu0 0.0
    %400 = vmatpush1.msra.mxu0 0.0
    %401 = vmatprep.subr.mxu0 0.0
    %402 = vmatpush1.msra.mxu0 0.0
    %403 = vmatprep.mubr.f32.mxu0 0.0
    %404 = vmatmul.mubr.f32.gmra.mrb[0].mxu0 %v124
    %v405 = vpop.f32.mrb[0].mxu0
    %v406 = vadd.f32 0.0, %v405
    %v407 = vpop.f32.mrb[0].mxu0
    %v408 = vadd.f32 0.0, %v407
    %409 = vdwg.mxu0
    %v410 = vpack.c.bf16 %v193, %v193
    %v411 = vpack.c.bf16 %v195, %v195
    %v412 = vpack.c.bf16 %v264, %v264
    %v413 = vpack.c.bf16 %v266, %v266
    %v414 = vpack.c.bf16 %v335, %v335
    %v415 = vpack.c.bf16 %v337, %v337
    %v416 = vpack.c.bf16 %v406, %v406
    %v417 = vpack.c.bf16 %v408, %v408
    %v418 = vld [vmem:[%s2] sm:$0xff]
    %v420 = vcombine.high %v418, %v418
    %v422 = vunpack.c.l.s4 1966171168
    %v423 = vunpack.c.0.s8 %v422
    %v424 = vlaneseq
    %v425 = vshrl.u32 %v424, 7
    %v426 = vsub.s32 %v423, %v425
    %v427 = vrot.slane %v418, %v426
    %v429 = vunpack.c.l.s4 1966171168
    %v430 = vunpack.c.0.s8 %v429
    %v431 = vlaneseq
    %v432 = vshrl.u32 %v431, 7
    %v433 = vsub.s32 %v430, %v432
    %v434 = vrot.slane %v420, %v433
    %v435 = vcombine.high %v427, %v427
    %v436 = vcombine.high %v434, %v434
    %v438 = vunpack.c.l.s4 1966171168
    %v439 = vunpack.c.0.s8 %v438
    %v440 = vlaneseq
    %v441 = vshrl.u32 %v440, 7
    %v442 = vsub.s32 %v439, %v441
    %v443 = vrot.slane %v427, %v442
    %v445 = vunpack.c.l.s4 1966171168
    %v446 = vunpack.c.0.s8 %v445
    %v447 = vlaneseq
    %v448 = vshrl.u32 %v447, 7
    %v449 = vsub.s32 %v446, %v448
    %v450 = vrot.slane %v434, %v449
    %v452 = vunpack.c.l.s4 1966171168
    %v453 = vunpack.c.0.s8 %v452
    %v454 = vlaneseq
    %v455 = vshrl.u32 %v454, 7
    %v456 = vsub.s32 %v453, %v455
    %v457 = vrot.slane %v435, %v456
    %v459 = vunpack.c.l.s4 1966171168
    %v460 = vunpack.c.0.s8 %v459
    %v461 = vlaneseq
    %v462 = vshrl.u32 %v461, 7
    %v463 = vsub.s32 %v460, %v462
    %v464 = vrot.slane %v436, %v463
    %v465 = vcombine.high %v443, %v443
    %v466 = vcombine.high %v450, %v450
    %v467 = vcombine.high %v457, %v457
    %v468 = vcombine.high %v464, %v464
    %v470 = vpack.i.b16 %v443, %v443
    %v472 = vlaneseq
    %v473 = vshrl.u32 %v472, 7
    %v474 = vsub.s32 0, %v473
    %v475 = vrot.slane %v470, %v474
    %v477 = vpack.i.b16 %v457, %v457
    %v479 = vlaneseq
    %v480 = vshrl.u32 %v479, 7
    %v481 = vsub.s32 0, %v480
    %v482 = vrot.slane %v477, %v481
    %v484 = vpack.i.b16 %v465, %v465
    %v486 = vlaneseq
    %v487 = vshrl.u32 %v486, 7
    %v488 = vsub.s32 0, %v487
    %v489 = vrot.slane %v484, %v488
    %v491 = vpack.i.b16 %v467, %v467
    %v493 = vlaneseq
    %v494 = vshrl.u32 %v493, 7
    %v495 = vsub.s32 0, %v494
    %v496 = vrot.slane %v491, %v495
    %v498 = vpack.i.b16 %v450, %v450
    %v500 = vlaneseq
    %v501 = vshrl.u32 %v500, 7
    %v502 = vsub.s32 0, %v501
    %v503 = vrot.slane %v498, %v502
    %v505 = vpack.i.b16 %v464, %v464
    %v507 = vlaneseq
    %v508 = vshrl.u32 %v507, 7
    %v509 = vsub.s32 0, %v508
    %v510 = vrot.slane %v505, %v509
    %v512 = vpack.i.b16 %v466, %v466
    %v514 = vlaneseq
    %v515 = vshrl.u32 %v514, 7
    %v516 = vsub.s32 0, %v515
    %v517 = vrot.slane %v512, %v516
    %v519 = vpack.i.b16 %v468, %v468
    %v521 = vlaneseq
    %v522 = vshrl.u32 %v521, 7
    %v523 = vsub.s32 0, %v522
    %v524 = vrot.slane %v519, %v523
    %v525 = vadd.bf16 %v410, %v475
    %v526 = vadd.bf16 %v411, %v482
    %v527 = vadd.bf16 %v412, %v489
    %v528 = vadd.bf16 %v413, %v496
    %v529 = vadd.bf16 %v414, %v503
    %v530 = vadd.bf16 %v415, %v510
    %v531 = vadd.bf16 %v416, %v517
    %v532 = vadd.bf16 %v417, %v524
    %v533 = vmax.bf16 %v525, 0
    %v534 = vmax.bf16 %v526, 0
    %v535 = vmax.bf16 %v527, 0
    %v536 = vmax.bf16 %v528, 0
    %v537 = vmax.bf16 %v529, 0
    %v538 = vmax.bf16 %v530, 0
    %v539 = vmax.bf16 %v531, 0
    %v540 = vmax.bf16 %v532, 0
    %v541 = vld [vmem:[#allocation8] sm:$0xff]
    %v542 = vld [vmem:[#allocation8 + $0x8] sm:$0xff]
    %v543 = vld [vmem:[#allocation8 + $0x10] sm:$0xff]
    %v544 = vld [vmem:[#allocation8 + $0x18] sm:$0xff]
    %v545 = vld [vmem:[#allocation8 + $0x20] sm:$0xff]
    %v546 = vld [vmem:[#allocation8 + $0x28] sm:$0xff]
    %v547 = vld [vmem:[#allocation8 + $0x30] sm:$0xff]
    %v548 = vld [vmem:[#allocation8 + $0x38] sm:$0xff]
    %v549 = vld [vmem:[#allocation8 + $0x40] sm:$0xff]
    %v550 = vld [vmem:[#allocation8 + $0x48] sm:$0xff]
    %v551 = vld [vmem:[#allocation8 + $0x50] sm:$0xff]
    %v552 = vld [vmem:[#allocation8 + $0x58] sm:$0xff]
    %v553 = vld [vmem:[#allocation8 + $0x60] sm:$0xff]
    %v554 = vld [vmem:[#allocation8 + $0x68] sm:$0xff]
    %v555 = vld [vmem:[#allocation8 + $0x70] sm:$0xff]
    %v556 = vld [vmem:[#allocation8 + $0x78] sm:$0xff]
    %v557 = vld [vmem:[#allocation8 + $0x80] sm:$0xff]
    %v558 = vld [vmem:[#allocation8 + $0x88] sm:$0xff]
    %v559 = vld [vmem:[#allocation8 + $0x90] sm:$0xff]
    %v560 = vld [vmem:[#allocation8 + $0x98] sm:$0xff]
    %v561 = vld [vmem:[#allocation8 + $0xa0] sm:$0xff]
    %v562 = vld [vmem:[#allocation8 + $0xa8] sm:$0xff]
    %v563 = vld [vmem:[#allocation8 + $0xb0] sm:$0xff]
    %v564 = vld [vmem:[#allocation8 + $0xb8] sm:$0xff]
    %v565 = vld [vmem:[#allocation8 + $0xc0] sm:$0xff]
    %v566 = vld [vmem:[#allocation8 + $0xc8] sm:$0xff]
    %v567 = vld [vmem:[#allocation8 + $0xd0] sm:$0xff]
    %v568 = vld [vmem:[#allocation8 + $0xd8] sm:$0xff]
    %v569 = vld [vmem:[#allocation8 + $0xe0] sm:$0xff]
    %v570 = vld [vmem:[#allocation8 + $0xe8] sm:$0xff]
    %v571 = vld [vmem:[#allocation8 + $0xf0] sm:$0xff]
    %v572 = vld [vmem:[#allocation8 + $0xf8] sm:$0xff]
    %v573 = vld [vmem:[#allocation8 + $0x100] sm:$0xff]
    %v574 = vld [vmem:[#allocation8 + $0x108] sm:$0xff]
    %v575 = vld [vmem:[#allocation8 + $0x110] sm:$0xff]
    %v576 = vld [vmem:[#allocation8 + $0x118] sm:$0xff]
    %v577 = vld [vmem:[#allocation8 + $0x120] sm:$0xff]
    %v578 = vld [vmem:[#allocation8 + $0x128] sm:$0xff]
    %v579 = vld [vmem:[#allocation8 + $0x130] sm:$0xff]
    %v580 = vld [vmem:[#allocation8 + $0x138] sm:$0xff]
    %v581 = vld [vmem:[#allocation8 + $0x140] sm:$0xff]
    %v582 = vld [vmem:[#allocation8 + $0x148] sm:$0xff]
    %v583 = vld [vmem:[#allocation8 + $0x150] sm:$0xff]
    %v584 = vld [vmem:[#allocation8 + $0x158] sm:$0xff]
    %v585 = vld [vmem:[#allocation8 + $0x160] sm:$0xff]
    %v586 = vld [vmem:[#allocation8 + $0x168] sm:$0xff]
    %v587 = vld [vmem:[#allocation8 + $0x170] sm:$0xff]
    %v588 = vld [vmem:[#allocation8 + $0x178] sm:$0xff]
    %v589 = vld [vmem:[#allocation8 + $0x180] sm:$0xff]
    %v590 = vld [vmem:[#allocation8 + $0x188] sm:$0xff]
    %v591 = vld [vmem:[#allocation8 + $0x190] sm:$0xff]
    %v592 = vld [vmem:[#allocation8 + $0x198] sm:$0xff]
    %v593 = vld [vmem:[#allocation8 + $0x1a0] sm:$0xff]
    %v594 = vld [vmem:[#allocation8 + $0x1a8] sm:$0xff]
    %v595 = vld [vmem:[#allocation8 + $0x1b0] sm:$0xff]
    %v596 = vld [vmem:[#allocation8 + $0x1b8] sm:$0xff]
    %v597 = vld [vmem:[#allocation8 + $0x1c0] sm:$0xff]
    %v598 = vld [vmem:[#allocation8 + $0x1c8] sm:$0xff]
    %v599 = vld [vmem:[#allocation8 + $0x1d0] sm:$0xff]
    %v600 = vld [vmem:[#allocation8 + $0x1d8] sm:$0xff]
    %v601 = vld [vmem:[#allocation8 + $0x1e0] sm:$0xff]
    %v602 = vld [vmem:[#allocation8 + $0x1e8] sm:$0xff]
    %v603 = vld [vmem:[#allocation8 + $0x1f0] sm:$0xff]
    %v604 = vld [vmem:[#allocation8 + $0x1f8] sm:$0xff]
    %v605 = vld [vmem:[#allocation8 + $0x200] sm:$0xff]
    %v606 = vld [vmem:[#allocation8 + $0x208] sm:$0xff]
    %v607 = vld [vmem:[#allocation8 + $0x210] sm:$0xff]
    %v608 = vld [vmem:[#allocation8 + $0x218] sm:$0xff]
    %v609 = vld [vmem:[#allocation8 + $0x220] sm:$0xff]
    %v610 = vld [vmem:[#allocation8 + $0x228] sm:$0xff]
    %v611 = vld [vmem:[#allocation8 + $0x230] sm:$0xff]
    %v612 = vld [vmem:[#allocation8 + $0x238] sm:$0xff]
    %v613 = vld [vmem:[#allocation8 + $0x240] sm:$0xff]
    %v614 = vld [vmem:[#allocation8 + $0x248] sm:$0xff]
    %v615 = vld [vmem:[#allocation8 + $0x250] sm:$0xff]
    %v616 = vld [vmem:[#allocation8 + $0x258] sm:$0xff]
    %v617 = vld [vmem:[#allocation8 + $0x260] sm:$0xff]
    %v618 = vld [vmem:[#allocation8 + $0x268] sm:$0xff]
    %v619 = vld [vmem:[#allocation8 + $0x270] sm:$0xff]
    %v620 = vld [vmem:[#allocation8 + $0x278] sm:$0xff]
    %v621 = vld [vmem:[#allocation8 + $0x280] sm:$0xff]
    %v622 = vld [vmem:[#allocation8 + $0x288] sm:$0xff]
    %v623 = vld [vmem:[#allocation8 + $0x290] sm:$0xff]
    %v624 = vld [vmem:[#allocation8 + $0x298] sm:$0xff]
    %v625 = vld [vmem:[#allocation8 + $0x2a0] sm:$0xff]
    %v626 = vld [vmem:[#allocation8 + $0x2a8] sm:$0xff]
    %v627 = vld [vmem:[#allocation8 + $0x2b0] sm:$0xff]
    %v628 = vld [vmem:[#allocation8 + $0x2b8] sm:$0xff]
    %v629 = vld [vmem:[#allocation8 + $0x2c0] sm:$0xff]
    %v630 = vld [vmem:[#allocation8 + $0x2c8] sm:$0xff]
    %v631 = vld [vmem:[#allocation8 + $0x2d0] sm:$0xff]
    %v632 = vld [vmem:[#allocation8 + $0x2d8] sm:$0xff]
    %v633 = vld [vmem:[#allocation8 + $0x2e0] sm:$0xff]
    %v634 = vld [vmem:[#allocation8 + $0x2e8] sm:$0xff]
    %v635 = vld [vmem:[#allocation8 + $0x2f0] sm:$0xff]
    %v636 = vld [vmem:[#allocation8 + $0x2f8] sm:$0xff]
    %v637 = vld [vmem:[#allocation8 + $0x300] sm:$0xff]
    %v638 = vld [vmem:[#allocation8 + $0x308] sm:$0xff]
    %v639 = vld [vmem:[#allocation8 + $0x310] sm:$0xff]
    %v640 = vld [vmem:[#allocation8 + $0x318] sm:$0xff]
    %v641 = vld [vmem:[#allocation8 + $0x320] sm:$0xff]
    %v642 = vld [vmem:[#allocation8 + $0x328] sm:$0xff]
    %v643 = vld [vmem:[#allocation8 + $0x330] sm:$0xff]
    %v644 = vld [vmem:[#allocation8 + $0x338] sm:$0xff]
    %v645 = vld [vmem:[#allocation8 + $0x340] sm:$0xff]
    %v646 = vld [vmem:[#allocation8 + $0x348] sm:$0xff]
    %v647 = vld [vmem:[#allocation8 + $0x350] sm:$0xff]
    %v648 = vld [vmem:[#allocation8 + $0x358] sm:$0xff]
    %v649 = vld [vmem:[#allocation8 + $0x360] sm:$0xff]
    %v650 = vld [vmem:[#allocation8 + $0x368] sm:$0xff]
    %v651 = vld [vmem:[#allocation8 + $0x370] sm:$0xff]
    %v652 = vld [vmem:[#allocation8 + $0x378] sm:$0xff]
    %v653 = vld [vmem:[#allocation8 + $0x380] sm:$0xff]
    %v654 = vld [vmem:[#allocation8 + $0x388] sm:$0xff]
    %v655 = vld [vmem:[#allocation8 + $0x390] sm:$0xff]
    %v656 = vld [vmem:[#allocation8 + $0x398] sm:$0xff]
    %v657 = vld [vmem:[#allocation8 + $0x3a0] sm:$0xff]
    %v658 = vld [vmem:[#allocation8 + $0x3a8] sm:$0xff]
    %v659 = vld [vmem:[#allocation8 + $0x3b0] sm:$0xff]
    %v660 = vld [vmem:[#allocation8 + $0x3b8] sm:$0xff]
    %v661 = vld [vmem:[#allocation8 + $0x3c0] sm:$0xff]
    %v662 = vld [vmem:[#allocation8 + $0x3c8] sm:$0xff]
    %v663 = vld [vmem:[#allocation8 + $0x3d0] sm:$0xff]
    %v664 = vld [vmem:[#allocation8 + $0x3d8] sm:$0xff]
    %v665 = vld [vmem:[#allocation8 + $0x3e0] sm:$0xff]
    %v666 = vld [vmem:[#allocation8 + $0x3e8] sm:$0xff]
    %v667 = vld [vmem:[#allocation8 + $0x3f0] sm:$0xff]
    %v668 = vld [vmem:[#allocation8 + $0x3f8] sm:$0xff]
    %v669 = vld [vmem:[#allocation8 + $0x400] sm:$0xff]
    %v670 = vld [vmem:[#allocation8 + $0x408] sm:$0xff]
    %v671 = vld [vmem:[#allocation8 + $0x410] sm:$0xff]
    %v672 = vld [vmem:[#allocation8 + $0x418] sm:$0xff]
    %v673 = vld [vmem:[#allocation8 + $0x420] sm:$0xff]
    %v674 = vld [vmem:[#allocation8 + $0x428] sm:$0xff]
    %v675 = vld [vmem:[#allocation8 + $0x430] sm:$0xff]
    %v676 = vld [vmem:[#allocation8 + $0x438] sm:$0xff]
    %v677 = vld [vmem:[#allocation8 + $0x440] sm:$0xff]
    %v678 = vld [vmem:[#allocation8 + $0x448] sm:$0xff]
    %v679 = vld [vmem:[#allocation8 + $0x450] sm:$0xff]
    %v680 = vld [vmem:[#allocation8 + $0x458] sm:$0xff]
    %v681 = vld [vmem:[#allocation8 + $0x460] sm:$0xff]
    %v682 = vld [vmem:[#allocation8 + $0x468] sm:$0xff]
    %v683 = vld [vmem:[#allocation8 + $0x470] sm:$0xff]
    %v684 = vld [vmem:[#allocation8 + $0x478] sm:$0xff]
    %v685 = vld [vmem:[#allocation8 + $0x480] sm:$0xff]
    %v686 = vld [vmem:[#allocation8 + $0x488] sm:$0xff]
    %v687 = vld [vmem:[#allocation8 + $0x490] sm:$0xff]
    %v688 = vld [vmem:[#allocation8 + $0x498] sm:$0xff]
    %v689 = vld [vmem:[#allocation8 + $0x4a0] sm:$0xff]
    %v690 = vld [vmem:[#allocation8 + $0x4a8] sm:$0xff]
    %v691 = vld [vmem:[#allocation8 + $0x4b0] sm:$0xff]
    %v692 = vld [vmem:[#allocation8 + $0x4b8] sm:$0xff]
    %v693 = vld [vmem:[#allocation8 + $0x4c0] sm:$0xff]
    %v694 = vld [vmem:[#allocation8 + $0x4c8] sm:$0xff]
    %v695 = vld [vmem:[#allocation8 + $0x4d0] sm:$0xff]
    %v696 = vld [vmem:[#allocation8 + $0x4d8] sm:$0xff]
    %v697 = vld [vmem:[#allocation8 + $0x4e0] sm:$0xff]
    %v698 = vld [vmem:[#allocation8 + $0x4e8] sm:$0xff]
    %v699 = vld [vmem:[#allocation8 + $0x4f0] sm:$0xff]
    %v700 = vld [vmem:[#allocation8 + $0x4f8] sm:$0xff]
    %v701 = vld [vmem:[#allocation8 + $0x500] sm:$0xff]
    %v702 = vld [vmem:[#allocation8 + $0x508] sm:$0xff]
    %v703 = vld [vmem:[#allocation8 + $0x510] sm:$0xff]
    %v704 = vld [vmem:[#allocation8 + $0x518] sm:$0xff]
    %v705 = vld [vmem:[#allocation8 + $0x520] sm:$0xff]
    %v706 = vld [vmem:[#allocation8 + $0x528] sm:$0xff]
    %v707 = vld [vmem:[#allocation8 + $0x530] sm:$0xff]
    %v708 = vld [vmem:[#allocation8 + $0x538] sm:$0xff]
    %v709 = vld [vmem:[#allocation8 + $0x540] sm:$0xff]
    %v710 = vld [vmem:[#allocation8 + $0x548] sm:$0xff]
    %v711 = vld [vmem:[#allocation8 + $0x550] sm:$0xff]
    %v712 = vld [vmem:[#allocation8 + $0x558] sm:$0xff]
    %v713 = vld [vmem:[#allocation8 + $0x560] sm:$0xff]
    %v714 = vld [vmem:[#allocation8 + $0x568] sm:$0xff]
    %v715 = vld [vmem:[#allocation8 + $0x570] sm:$0xff]
    %v716 = vld [vmem:[#allocation8 + $0x578] sm:$0xff]
    %v717 = vld [vmem:[#allocation8 + $0x580] sm:$0xff]
    %v718 = vld [vmem:[#allocation8 + $0x588] sm:$0xff]
    %v719 = vld [vmem:[#allocation8 + $0x590] sm:$0xff]
    %v720 = vld [vmem:[#allocation8 + $0x598] sm:$0xff]
    %v721 = vld [vmem:[#allocation8 + $0x5a0] sm:$0xff]
    %v722 = vld [vmem:[#allocation8 + $0x5a8] sm:$0xff]
    %v723 = vld [vmem:[#allocation8 + $0x5b0] sm:$0xff]
    %v724 = vld [vmem:[#allocation8 + $0x5b8] sm:$0xff]
    %v725 = vld [vmem:[#allocation8 + $0x5c0] sm:$0xff]
    %v726 = vld [vmem:[#allocation8 + $0x5c8] sm:$0xff]
    %v727 = vld [vmem:[#allocation8 + $0x5d0] sm:$0xff]
    %v728 = vld [vmem:[#allocation8 + $0x5d8] sm:$0xff]
    %v729 = vld [vmem:[#allocation8 + $0x5e0] sm:$0xff]
    %v730 = vld [vmem:[#allocation8 + $0x5e8] sm:$0xff]
    %v731 = vld [vmem:[#allocation8 + $0x5f0] sm:$0xff]
    %v732 = vld [vmem:[#allocation8 + $0x5f8] sm:$0xff]
    %v733 = vld [vmem:[#allocation8 + $0x600] sm:$0xff]
    %v734 = vld [vmem:[#allocation8 + $0x608] sm:$0xff]
    %v735 = vld [vmem:[#allocation8 + $0x610] sm:$0xff]
    %v736 = vld [vmem:[#allocation8 + $0x618] sm:$0xff]
    %v737 = vld [vmem:[#allocation8 + $0x620] sm:$0xff]
    %v738 = vld [vmem:[#allocation8 + $0x628] sm:$0xff]
    %v739 = vld [vmem:[#allocation8 + $0x630] sm:$0xff]
    %v740 = vld [vmem:[#allocation8 + $0x638] sm:$0xff]
    %v741 = vld [vmem:[#allocation8 + $0x640] sm:$0xff]
    %v742 = vld [vmem:[#allocation8 + $0x648] sm:$0xff]
    %v743 = vld [vmem:[#allocation8 + $0x650] sm:$0xff]
    %v744 = vld [vmem:[#allocation8 + $0x658] sm:$0xff]
    %v745 = vld [vmem:[#allocation8 + $0x660] sm:$0xff]
    %v746 = vld [vmem:[#allocation8 + $0x668] sm:$0xff]
    %v747 = vld [vmem:[#allocation8 + $0x670] sm:$0xff]
    %v748 = vld [vmem:[#allocation8 + $0x678] sm:$0xff]
    %v749 = vld [vmem:[#allocation8 + $0x680] sm:$0xff]
    %v750 = vld [vmem:[#allocation8 + $0x688] sm:$0xff]
    %v751 = vld [vmem:[#allocation8 + $0x690] sm:$0xff]
    %v752 = vld [vmem:[#allocation8 + $0x698] sm:$0xff]
    %v753 = vld [vmem:[#allocation8 + $0x6a0] sm:$0xff]
    %v754 = vld [vmem:[#allocation8 + $0x6a8] sm:$0xff]
    %v755 = vld [vmem:[#allocation8 + $0x6b0] sm:$0xff]
    %v756 = vld [vmem:[#allocation8 + $0x6b8] sm:$0xff]
    %v757 = vld [vmem:[#allocation8 + $0x6c0] sm:$0xff]
    %v758 = vld [vmem:[#allocation8 + $0x6c8] sm:$0xff]
    %v759 = vld [vmem:[#allocation8 + $0x6d0] sm:$0xff]
    %v760 = vld [vmem:[#allocation8 + $0x6d8] sm:$0xff]
    %v761 = vld [vmem:[#allocation8 + $0x6e0] sm:$0xff]
    %v762 = vld [vmem:[#allocation8 + $0x6e8] sm:$0xff]
    %v763 = vld [vmem:[#allocation8 + $0x6f0] sm:$0xff]
    %v764 = vld [vmem:[#allocation8 + $0x6f8] sm:$0xff]
    %v765 = vld [vmem:[#allocation8 + $0x700] sm:$0xff]
    %v766 = vld [vmem:[#allocation8 + $0x708] sm:$0xff]
    %v767 = vld [vmem:[#allocation8 + $0x710] sm:$0xff]
    %v768 = vld [vmem:[#allocation8 + $0x718] sm:$0xff]
    %v769 = vld [vmem:[#allocation8 + $0x720] sm:$0xff]
    %v770 = vld [vmem:[#allocation8 + $0x728] sm:$0xff]
    %v771 = vld [vmem:[#allocation8 + $0x730] sm:$0xff]
    %v772 = vld [vmem:[#allocation8 + $0x738] sm:$0xff]
    %v773 = vld [vmem:[#allocation8 + $0x740] sm:$0xff]
    %v774 = vld [vmem:[#allocation8 + $0x748] sm:$0xff]
    %v775 = vld [vmem:[#allocation8 + $0x750] sm:$0xff]
    %v776 = vld [vmem:[#allocation8 + $0x758] sm:$0xff]
    %v777 = vld [vmem:[#allocation8 + $0x760] sm:$0xff]
    %v778 = vld [vmem:[#allocation8 + $0x768] sm:$0xff]
    %v779 = vld [vmem:[#allocation8 + $0x770] sm:$0xff]
    %v780 = vld [vmem:[#allocation8 + $0x778] sm:$0xff]
    %v781 = vld [vmem:[#allocation8 + $0x780] sm:$0xff]
    %v782 = vld [vmem:[#allocation8 + $0x788] sm:$0xff]
    %v783 = vld [vmem:[#allocation8 + $0x790] sm:$0xff]
    %v784 = vld [vmem:[#allocation8 + $0x798] sm:$0xff]
    %v785 = vld [vmem:[#allocation8 + $0x7a0] sm:$0xff]
    %v786 = vld [vmem:[#allocation8 + $0x7a8] sm:$0xff]
    %v787 = vld [vmem:[#allocation8 + $0x7b0] sm:$0xff]
    %v788 = vld [vmem:[#allocation8 + $0x7b8] sm:$0xff]
    %v789 = vld [vmem:[#allocation8 + $0x7c0] sm:$0xff]
    %v790 = vld [vmem:[#allocation8 + $0x7c8] sm:$0xff]
    %v791 = vld [vmem:[#allocation8 + $0x7d0] sm:$0xff]
    %v792 = vld [vmem:[#allocation8 + $0x7d8] sm:$0xff]
    %v793 = vld [vmem:[#allocation8 + $0x7e0] sm:$0xff]
    %v794 = vld [vmem:[#allocation8 + $0x7e8] sm:$0xff]
    %v795 = vld [vmem:[#allocation8 + $0x7f0] sm:$0xff]
    %v796 = vld [vmem:[#allocation8 + $0x7f8] sm:$0xff]
    %v1053 = vunpack.c.l.b16 %v541
    %v1054 = vunpack.c.h.b16 %v541
    %v1055 = vunpack.c.l.b16 %v542
    %v1056 = vunpack.c.h.b16 %v542
    %v1057 = vunpack.c.l.b16 %v543
    %v1058 = vunpack.c.h.b16 %v543
    %v1059 = vunpack.c.l.b16 %v544
    %v1060 = vunpack.c.h.b16 %v544
    %v1061 = vunpack.c.l.b16 %v545
    %v1062 = vunpack.c.h.b16 %v545
    %v1063 = vunpack.c.l.b16 %v546
    %v1064 = vunpack.c.h.b16 %v546
    %v1065 = vunpack.c.l.b16 %v547
    %v1066 = vunpack.c.h.b16 %v547
    %v1067 = vunpack.c.l.b16 %v548
    %v1068 = vunpack.c.h.b16 %v548
    %v1069 = vunpack.c.l.b16 %v549
    %v1070 = vunpack.c.h.b16 %v549
    %v1071 = vunpack.c.l.b16 %v550
    %v1072 = vunpack.c.h.b16 %v550
    %v1073 = vunpack.c.l.b16 %v551
    %v1074 = vunpack.c.h.b16 %v551
    %v1075 = vunpack.c.l.b16 %v552
    %v1076 = vunpack.c.h.b16 %v552
    %v1077 = vunpack.c.l.b16 %v553
    %v1078 = vunpack.c.h.b16 %v553
    %v1079 = vunpack.c.l.b16 %v554
    %v1080 = vunpack.c.h.b16 %v554
    %v1081 = vunpack.c.l.b16 %v555
    %v1082 = vunpack.c.h.b16 %v555
    %v1083 = vunpack.c.l.b16 %v556
    %v1084 = vunpack.c.h.b16 %v556
    %v1085 = vunpack.c.l.b16 %v557
    %v1086 = vunpack.c.h.b16 %v557
    %v1087 = vunpack.c.l.b16 %v558
    %v1088 = vunpack.c.h.b16 %v558
    %v1089 = vunpack.c.l.b16 %v559
    %v1090 = vunpack.c.h.b16 %v559
    %v1091 = vunpack.c.l.b16 %v560
    %v1092 = vunpack.c.h.b16 %v560
    %v1093 = vunpack.c.l.b16 %v561
    %v1094 = vunpack.c.h.b16 %v561
    %v1095 = vunpack.c.l.b16 %v562
    %v1096 = vunpack.c.h.b16 %v562
    %v1097 = vunpack.c.l.b16 %v563
    %v1098 = vunpack.c.h.b16 %v563
    %v1099 = vunpack.c.l.b16 %v564
    %v1100 = vunpack.c.h.b16 %v564
    %v1101 = vunpack.c.l.b16 %v565
    %v1102 = vunpack.c.h.b16 %v565
    %v1103 = vunpack.c.l.b16 %v566
    %v1104 = vunpack.c.h.b16 %v566
    %v1105 = vunpack.c.l.b16 %v567
    %v1106 = vunpack.c.h.b16 %v567
    %v1107 = vunpack.c.l.b16 %v568
    %v1108 = vunpack.c.h.b16 %v568
    %v1109 = vunpack.c.l.b16 %v569
    %v1110 = vunpack.c.h.b16 %v569
    %v1111 = vunpack.c.l.b16 %v570
    %v1112 = vunpack.c.h.b16 %v570
    %v1113 = vunpack.c.l.b16 %v571
    %v1114 = vunpack.c.h.b16 %v571
    %v1115 = vunpack.c.l.b16 %v572
    %v1116 = vunpack.c.h.b16 %v572
    %v1117 = vunpack.c.l.b16 %v573
    %v1118 = vunpack.c.h.b16 %v573
    %v1119 = vunpack.c.l.b16 %v574
    %v1120 = vunpack.c.h.b16 %v574
    %v1121 = vunpack.c.l.b16 %v575
    %v1122 = vunpack.c.h.b16 %v575
    %v1123 = vunpack.c.l.b16 %v576
    %v1124 = vunpack.c.h.b16 %v576
    %v1125 = vunpack.c.l.b16 %v577
    %v1126 = vunpack.c.h.b16 %v577
    %v1127 = vunpack.c.l.b16 %v578
    %v1128 = vunpack.c.h.b16 %v578
    %v1129 = vunpack.c.l.b16 %v579
    %v1130 = vunpack.c.h.b16 %v579
    %v1131 = vunpack.c.l.b16 %v580
    %v1132 = vunpack.c.h.b16 %v580
    %v1133 = vunpack.c.l.b16 %v581
    %v1134 = vunpack.c.h.b16 %v581
    %v1135 = vunpack.c.l.b16 %v582
    %v1136 = vunpack.c.h.b16 %v582
    %v1137 = vunpack.c.l.b16 %v583
    %v1138 = vunpack.c.h.b16 %v583
    %v1139 = vunpack.c.l.b16 %v584
    %v1140 = vunpack.c.h.b16 %v584
    %v1141 = vunpack.c.l.b16 %v585
    %v1142 = vunpack.c.h.b16 %v585
    %v1143 = vunpack.c.l.b16 %v586
    %v1144 = vunpack.c.h.b16 %v586
    %v1145 = vunpack.c.l.b16 %v587
    %v1146 = vunpack.c.h.b16 %v587
    %v1147 = vunpack.c.l.b16 %v588
    %v1148 = vunpack.c.h.b16 %v588
    %v1149 = vunpack.c.l.b16 %v589
    %v1150 = vunpack.c.h.b16 %v589
    %v1151 = vunpack.c.l.b16 %v590
    %v1152 = vunpack.c.h.b16 %v590
    %v1153 = vunpack.c.l.b16 %v591
    %v1154 = vunpack.c.h.b16 %v591
    %v1155 = vunpack.c.l.b16 %v592
    %v1156 = vunpack.c.h.b16 %v592
    %v1157 = vunpack.c.l.b16 %v593
    %v1158 = vunpack.c.h.b16 %v593
    %v1159 = vunpack.c.l.b16 %v594
    %v1160 = vunpack.c.h.b16 %v594
    %v1161 = vunpack.c.l.b16 %v595
    %v1162 = vunpack.c.h.b16 %v595
    %v1163 = vunpack.c.l.b16 %v596
    %v1164 = vunpack.c.h.b16 %v596
    %v1165 = vunpack.c.l.b16 %v597
    %v1166 = vunpack.c.h.b16 %v597
    %v1167 = vunpack.c.l.b16 %v598
    %v1168 = vunpack.c.h.b16 %v598
    %v1169 = vunpack.c.l.b16 %v599
    %v1170 = vunpack.c.h.b16 %v599
    %v1171 = vunpack.c.l.b16 %v600
    %v1172 = vunpack.c.h.b16 %v600
    %v1173 = vunpack.c.l.b16 %v601
    %v1174 = vunpack.c.h.b16 %v601
    %v1175 = vunpack.c.l.b16 %v602
    %v1176 = vunpack.c.h.b16 %v602
    %v1177 = vunpack.c.l.b16 %v603
    %v1178 = vunpack.c.h.b16 %v603
    %v1179 = vunpack.c.l.b16 %v604
    %v1180 = vunpack.c.h.b16 %v604
    %v1181 = vunpack.c.l.b16 %v605
    %v1182 = vunpack.c.h.b16 %v605
    %v1183 = vunpack.c.l.b16 %v606
    %v1184 = vunpack.c.h.b16 %v606
    %v1185 = vunpack.c.l.b16 %v607
    %v1186 = vunpack.c.h.b16 %v607
    %v1187 = vunpack.c.l.b16 %v608
    %v1188 = vunpack.c.h.b16 %v608
    %v1189 = vunpack.c.l.b16 %v609
    %v1190 = vunpack.c.h.b16 %v609
    %v1191 = vunpack.c.l.b16 %v610
    %v1192 = vunpack.c.h.b16 %v610
    %v1193 = vunpack.c.l.b16 %v611
    %v1194 = vunpack.c.h.b16 %v611
    %v1195 = vunpack.c.l.b16 %v612
    %v1196 = vunpack.c.h.b16 %v612
    %v1197 = vunpack.c.l.b16 %v613
    %v1198 = vunpack.c.h.b16 %v613
    %v1199 = vunpack.c.l.b16 %v614
    %v1200 = vunpack.c.h.b16 %v614
    %v1201 = vunpack.c.l.b16 %v615
    %v1202 = vunpack.c.h.b16 %v615
    %v1203 = vunpack.c.l.b16 %v616
    %v1204 = vunpack.c.h.b16 %v616
    %v1205 = vunpack.c.l.b16 %v617
    %v1206 = vunpack.c.h.b16 %v617
    %v1207 = vunpack.c.l.b16 %v618
    %v1208 = vunpack.c.h.b16 %v618
    %v1209 = vunpack.c.l.b16 %v619
    %v1210 = vunpack.c.h.b16 %v619
    %v1211 = vunpack.c.l.b16 %v620
    %v1212 = vunpack.c.h.b16 %v620
    %v1213 = vunpack.c.l.b16 %v621
    %v1214 = vunpack.c.h.b16 %v621
    %v1215 = vunpack.c.l.b16 %v622
    %v1216 = vunpack.c.h.b16 %v622
    %v1217 = vunpack.c.l.b16 %v623
    %v1218 = vunpack.c.h.b16 %v623
    %v1219 = vunpack.c.l.b16 %v624
    %v1220 = vunpack.c.h.b16 %v624
    %v1221 = vunpack.c.l.b16 %v625
    %v1222 = vunpack.c.h.b16 %v625
    %v1223 = vunpack.c.l.b16 %v626
    %v1224 = vunpack.c.h.b16 %v626
    %v1225 = vunpack.c.l.b16 %v627
    %v1226 = vunpack.c.h.b16 %v627
    %v1227 = vunpack.c.l.b16 %v628
    %v1228 = vunpack.c.h.b16 %v628
    %v1229 = vunpack.c.l.b16 %v629
    %v1230 = vunpack.c.h.b16 %v629
    %v1231 = vunpack.c.l.b16 %v630
    %v1232 = vunpack.c.h.b16 %v630
    %v1233 = vunpack.c.l.b16 %v631
    %v1234 = vunpack.c.h.b16 %v631
    %v1235 = vunpack.c.l.b16 %v632
    %v1236 = vunpack.c.h.b16 %v632
    %v1237 = vunpack.c.l.b16 %v633
    %v1238 = vunpack.c.h.b16 %v633
    %v1239 = vunpack.c.l.b16 %v634
    %v1240 = vunpack.c.h.b16 %v634
    %v1241 = vunpack.c.l.b16 %v635
    %v1242 = vunpack.c.h.b16 %v635
    %v1243 = vunpack.c.l.b16 %v636
    %v1244 = vunpack.c.h.b16 %v636
    %v1245 = vunpack.c.l.b16 %v637
    %v1246 = vunpack.c.h.b16 %v637
    %v1247 = vunpack.c.l.b16 %v638
    %v1248 = vunpack.c.h.b16 %v638
    %v1249 = vunpack.c.l.b16 %v639
    %v1250 = vunpack.c.h.b16 %v639
    %v1251 = vunpack.c.l.b16 %v640
    %v1252 = vunpack.c.h.b16 %v640
    %v1253 = vunpack.c.l.b16 %v641
    %v1254 = vunpack.c.h.b16 %v641
    %v1255 = vunpack.c.l.b16 %v642
    %v1256 = vunpack.c.h.b16 %v642
    %v1257 = vunpack.c.l.b16 %v643
    %v1258 = vunpack.c.h.b16 %v643
    %v1259 = vunpack.c.l.b16 %v644
    %v1260 = vunpack.c.h.b16 %v644
    %v1261 = vunpack.c.l.b16 %v645
    %v1262 = vunpack.c.h.b16 %v645
    %v1263 = vunpack.c.l.b16 %v646
    %v1264 = vunpack.c.h.b16 %v646
    %v1265 = vunpack.c.l.b16 %v647
    %v1266 = vunpack.c.h.b16 %v647
    %v1267 = vunpack.c.l.b16 %v648
    %v1268 = vunpack.c.h.b16 %v648
    %v1269 = vunpack.c.l.b16 %v649
    %v1270 = vunpack.c.h.b16 %v649
    %v1271 = vunpack.c.l.b16 %v650
    %v1272 = vunpack.c.h.b16 %v650
    %v1273 = vunpack.c.l.b16 %v651
    %v1274 = vunpack.c.h.b16 %v651
    %v1275 = vunpack.c.l.b16 %v652
    %v1276 = vunpack.c.h.b16 %v652
    %v1277 = vunpack.c.l.b16 %v653
    %v1278 = vunpack.c.h.b16 %v653
    %v1279 = vunpack.c.l.b16 %v654
    %v1280 = vunpack.c.h.b16 %v654
    %v1281 = vunpack.c.l.b16 %v655
    %v1282 = vunpack.c.h.b16 %v655
    %v1283 = vunpack.c.l.b16 %v656
    %v1284 = vunpack.c.h.b16 %v656
    %v1285 = vunpack.c.l.b16 %v657
    %v1286 = vunpack.c.h.b16 %v657
    %v1287 = vunpack.c.l.b16 %v658
    %v1288 = vunpack.c.h.b16 %v658
    %v1289 = vunpack.c.l.b16 %v659
    %v1290 = vunpack.c.h.b16 %v659
    %v1291 = vunpack.c.l.b16 %v660
    %v1292 = vunpack.c.h.b16 %v660
    %v1293 = vunpack.c.l.b16 %v661
    %v1294 = vunpack.c.h.b16 %v661
    %v1295 = vunpack.c.l.b16 %v662
    %v1296 = vunpack.c.h.b16 %v662
    %v1297 = vunpack.c.l.b16 %v663
    %v1298 = vunpack.c.h.b16 %v663
    %v1299 = vunpack.c.l.b16 %v664
    %v1300 = vunpack.c.h.b16 %v664
    %v1301 = vunpack.c.l.b16 %v665
    %v1302 = vunpack.c.h.b16 %v665
    %v1303 = vunpack.c.l.b16 %v666
    %v1304 = vunpack.c.h.b16 %v666
    %v1305 = vunpack.c.l.b16 %v667
    %v1306 = vunpack.c.h.b16 %v667
    %v1307 = vunpack.c.l.b16 %v668
    %v1308 = vunpack.c.h.b16 %v668
    %v1309 = vunpack.c.l.b16 %v669
    %v1310 = vunpack.c.h.b16 %v669
    %v1311 = vunpack.c.l.b16 %v670
    %v1312 = vunpack.c.h.b16 %v670
    %v1313 = vunpack.c.l.b16 %v671
    %v1314 = vunpack.c.h.b16 %v671
    %v1315 = vunpack.c.l.b16 %v672
    %v1316 = vunpack.c.h.b16 %v672
    %v1317 = vunpack.c.l.b16 %v673
    %v1318 = vunpack.c.h.b16 %v673
    %v1319 = vunpack.c.l.b16 %v674
    %v1320 = vunpack.c.h.b16 %v674
    %v1321 = vunpack.c.l.b16 %v675
    %v1322 = vunpack.c.h.b16 %v675
    %v1323 = vunpack.c.l.b16 %v676
    %v1324 = vunpack.c.h.b16 %v676
    %v1325 = vunpack.c.l.b16 %v677
    %v1326 = vunpack.c.h.b16 %v677
    %v1327 = vunpack.c.l.b16 %v678
    %v1328 = vunpack.c.h.b16 %v678
    %v1329 = vunpack.c.l.b16 %v679
    %v1330 = vunpack.c.h.b16 %v679
    %v1331 = vunpack.c.l.b16 %v680
    %v1332 = vunpack.c.h.b16 %v680
    %v1333 = vunpack.c.l.b16 %v681
    %v1334 = vunpack.c.h.b16 %v681
    %v1335 = vunpack.c.l.b16 %v682
    %v1336 = vunpack.c.h.b16 %v682
    %v1337 = vunpack.c.l.b16 %v683
    %v1338 = vunpack.c.h.b16 %v683
    %v1339 = vunpack.c.l.b16 %v684
    %v1340 = vunpack.c.h.b16 %v684
    %v1341 = vunpack.c.l.b16 %v685
    %v1342 = vunpack.c.h.b16 %v685
    %v1343 = vunpack.c.l.b16 %v686
    %v1344 = vunpack.c.h.b16 %v686
    %v1345 = vunpack.c.l.b16 %v687
    %v1346 = vunpack.c.h.b16 %v687
    %v1347 = vunpack.c.l.b16 %v688
    %v1348 = vunpack.c.h.b16 %v688
    %v1349 = vunpack.c.l.b16 %v689
    %v1350 = vunpack.c.h.b16 %v689
    %v1351 = vunpack.c.l.b16 %v690
    %v1352 = vunpack.c.h.b16 %v690
    %v1353 = vunpack.c.l.b16 %v691
    %v1354 = vunpack.c.h.b16 %v691
    %v1355 = vunpack.c.l.b16 %v692
    %v1356 = vunpack.c.h.b16 %v692
    %v1357 = vunpack.c.l.b16 %v693
    %v1358 = vunpack.c.h.b16 %v693
    %v1359 = vunpack.c.l.b16 %v694
    %v1360 = vunpack.c.h.b16 %v694
    %v1361 = vunpack.c.l.b16 %v695
    %v1362 = vunpack.c.h.b16 %v695
    %v1363 = vunpack.c.l.b16 %v696
    %v1364 = vunpack.c.h.b16 %v696
    %v1365 = vunpack.c.l.b16 %v697
    %v1366 = vunpack.c.h.b16 %v697
    %v1367 = vunpack.c.l.b16 %v698
    %v1368 = vunpack.c.h.b16 %v698
    %v1369 = vunpack.c.l.b16 %v699
    %v1370 = vunpack.c.h.b16 %v699
    %v1371 = vunpack.c.l.b16 %v700
    %v1372 = vunpack.c.h.b16 %v700
    %v1373 = vunpack.c.l.b16 %v701
    %v1374 = vunpack.c.h.b16 %v701
    %v1375 = vunpack.c.l.b16 %v702
    %v1376 = vunpack.c.h.b16 %v702
    %v1377 = vunpack.c.l.b16 %v703
    %v1378 = vunpack.c.h.b16 %v703
    %v1379 = vunpack.c.l.b16 %v704
    %v1380 = vunpack.c.h.b16 %v704
    %v1381 = vunpack.c.l.b16 %v705
    %v1382 = vunpack.c.h.b16 %v705
    %v1383 = vunpack.c.l.b16 %v706
    %v1384 = vunpack.c.h.b16 %v706
    %v1385 = vunpack.c.l.b16 %v707
    %v1386 = vunpack.c.h.b16 %v707
    %v1387 = vunpack.c.l.b16 %v708
    %v1388 = vunpack.c.h.b16 %v708
    %v1389 = vunpack.c.l.b16 %v709
    %v1390 = vunpack.c.h.b16 %v709
    %v1391 = vunpack.c.l.b16 %v710
    %v1392 = vunpack.c.h.b16 %v710
    %v1393 = vunpack.c.l.b16 %v711
    %v1394 = vunpack.c.h.b16 %v711
    %v1395 = vunpack.c.l.b16 %v712
    %v1396 = vunpack.c.h.b16 %v712
    %v1397 = vunpack.c.l.b16 %v713
    %v1398 = vunpack.c.h.b16 %v713
    %v1399 = vunpack.c.l.b16 %v714
    %v1400 = vunpack.c.h.b16 %v714
    %v1401 = vunpack.c.l.b16 %v715
    %v1402 = vunpack.c.h.b16 %v715
    %v1403 = vunpack.c.l.b16 %v716
    %v1404 = vunpack.c.h.b16 %v716
    %v1405 = vunpack.c.l.b16 %v717
    %v1406 = vunpack.c.h.b16 %v717
    %v1407 = vunpack.c.l.b16 %v718
    %v1408 = vunpack.c.h.b16 %v718
    %v1409 = vunpack.c.l.b16 %v719
    %v1410 = vunpack.c.h.b16 %v719
    %v1411 = vunpack.c.l.b16 %v720
    %v1412 = vunpack.c.h.b16 %v720
    %v1413 = vunpack.c.l.b16 %v721
    %v1414 = vunpack.c.h.b16 %v721
    %v1415 = vunpack.c.l.b16 %v722
    %v1416 = vunpack.c.h.b16 %v722
    %v1417 = vunpack.c.l.b16 %v723
    %v1418 = vunpack.c.h.b16 %v723
    %v1419 = vunpack.c.l.b16 %v724
    %v1420 = vunpack.c.h.b16 %v724
    %v1421 = vunpack.c.l.b16 %v725
    %v1422 = vunpack.c.h.b16 %v725
    %v1423 = vunpack.c.l.b16 %v726
    %v1424 = vunpack.c.h.b16 %v726
    %v1425 = vunpack.c.l.b16 %v727
    %v1426 = vunpack.c.h.b16 %v727
    %v1427 = vunpack.c.l.b16 %v728
    %v1428 = vunpack.c.h.b16 %v728
    %v1429 = vunpack.c.l.b16 %v729
    %v1430 = vunpack.c.h.b16 %v729
    %v1431 = vunpack.c.l.b16 %v730
    %v1432 = vunpack.c.h.b16 %v730
    %v1433 = vunpack.c.l.b16 %v731
    %v1434 = vunpack.c.h.b16 %v731
    %v1435 = vunpack.c.l.b16 %v732
    %v1436 = vunpack.c.h.b16 %v732
    %v1437 = vunpack.c.l.b16 %v733
    %v1438 = vunpack.c.h.b16 %v733
    %v1439 = vunpack.c.l.b16 %v734
    %v1440 = vunpack.c.h.b16 %v734
    %v1441 = vunpack.c.l.b16 %v735
    %v1442 = vunpack.c.h.b16 %v735
    %v1443 = vunpack.c.l.b16 %v736
    %v1444 = vunpack.c.h.b16 %v736
    %v1445 = vunpack.c.l.b16 %v737
    %v1446 = vunpack.c.h.b16 %v737
    %v1447 = vunpack.c.l.b16 %v738
    %v1448 = vunpack.c.h.b16 %v738
    %v1449 = vunpack.c.l.b16 %v739
    %v1450 = vunpack.c.h.b16 %v739
    %v1451 = vunpack.c.l.b16 %v740
    %v1452 = vunpack.c.h.b16 %v740
    %v1453 = vunpack.c.l.b16 %v741
    %v1454 = vunpack.c.h.b16 %v741
    %v1455 = vunpack.c.l.b16 %v742
    %v1456 = vunpack.c.h.b16 %v742
    %v1457 = vunpack.c.l.b16 %v743
    %v1458 = vunpack.c.h.b16 %v743
    %v1459 = vunpack.c.l.b16 %v744
    %v1460 = vunpack.c.h.b16 %v744
    %v1461 = vunpack.c.l.b16 %v745
    %v1462 = vunpack.c.h.b16 %v745
    %v1463 = vunpack.c.l.b16 %v746
    %v1464 = vunpack.c.h.b16 %v746
    %v1465 = vunpack.c.l.b16 %v747
    %v1466 = vunpack.c.h.b16 %v747
    %v1467 = vunpack.c.l.b16 %v748
    %v1468 = vunpack.c.h.b16 %v748
    %v1469 = vunpack.c.l.b16 %v749
    %v1470 = vunpack.c.h.b16 %v749
    %v1471 = vunpack.c.l.b16 %v750
    %v1472 = vunpack.c.h.b16 %v750
    %v1473 = vunpack.c.l.b16 %v751
    %v1474 = vunpack.c.h.b16 %v751
    %v1475 = vunpack.c.l.b16 %v752
    %v1476 = vunpack.c.h.b16 %v752
    %v1477 = vunpack.c.l.b16 %v753
    %v1478 = vunpack.c.h.b16 %v753
    %v1479 = vunpack.c.l.b16 %v754
    %v1480 = vunpack.c.h.b16 %v754
    %v1481 = vunpack.c.l.b16 %v755
    %v1482 = vunpack.c.h.b16 %v755
    %v1483 = vunpack.c.l.b16 %v756
    %v1484 = vunpack.c.h.b16 %v756
    %v1485 = vunpack.c.l.b16 %v757
    %v1486 = vunpack.c.h.b16 %v757
    %v1487 = vunpack.c.l.b16 %v758
    %v1488 = vunpack.c.h.b16 %v758
    %v1489 = vunpack.c.l.b16 %v759
    %v1490 = vunpack.c.h.b16 %v759
    %v1491 = vunpack.c.l.b16 %v760
    %v1492 = vunpack.c.h.b16 %v760
    %v1493 = vunpack.c.l.b16 %v761
    %v1494 = vunpack.c.h.b16 %v761
    %v1495 = vunpack.c.l.b16 %v762
    %v1496 = vunpack.c.h.b16 %v762
    %v1497 = vunpack.c.l.b16 %v763
    %v1498 = vunpack.c.h.b16 %v763
    %v1499 = vunpack.c.l.b16 %v764
    %v1500 = vunpack.c.h.b16 %v764
    %v1501 = vunpack.c.l.b16 %v765
    %v1502 = vunpack.c.h.b16 %v765
    %v1503 = vunpack.c.l.b16 %v766
    %v1504 = vunpack.c.h.b16 %v766
    %v1505 = vunpack.c.l.b16 %v767
    %v1506 = vunpack.c.h.b16 %v767
    %v1507 = vunpack.c.l.b16 %v768
    %v1508 = vunpack.c.h.b16 %v768
    %v1509 = vunpack.c.l.b16 %v769
    %v1510 = vunpack.c.h.b16 %v769
    %v1511 = vunpack.c.l.b16 %v770
    %v1512 = vunpack.c.h.b16 %v770
    %v1513 = vunpack.c.l.b16 %v771
    %v1514 = vunpack.c.h.b16 %v771
    %v1515 = vunpack.c.l.b16 %v772
    %v1516 = vunpack.c.h.b16 %v772
    %v1517 = vunpack.c.l.b16 %v773
    %v1518 = vunpack.c.h.b16 %v773
    %v1519 = vunpack.c.l.b16 %v774
    %v1520 = vunpack.c.h.b16 %v774
    %v1521 = vunpack.c.l.b16 %v775
    %v1522 = vunpack.c.h.b16 %v775
    %v1523 = vunpack.c.l.b16 %v776
    %v1524 = vunpack.c.h.b16 %v776
    %v1525 = vunpack.c.l.b16 %v777
    %v1526 = vunpack.c.h.b16 %v777
    %v1527 = vunpack.c.l.b16 %v778
    %v1528 = vunpack.c.h.b16 %v778
    %v1529 = vunpack.c.l.b16 %v779
    %v1530 = vunpack.c.h.b16 %v779
    %v1531 = vunpack.c.l.b16 %v780
    %v1532 = vunpack.c.h.b16 %v780
    %v1533 = vunpack.c.l.b16 %v781
    %v1534 = vunpack.c.h.b16 %v781
    %v1535 = vunpack.c.l.b16 %v782
    %v1536 = vunpack.c.h.b16 %v782
    %v1537 = vunpack.c.l.b16 %v783
    %v1538 = vunpack.c.h.b16 %v783
    %v1539 = vunpack.c.l.b16 %v784
    %v1540 = vunpack.c.h.b16 %v784
    %v1541 = vunpack.c.l.b16 %v785
    %v1542 = vunpack.c.h.b16 %v785
    %v1543 = vunpack.c.l.b16 %v786
    %v1544 = vunpack.c.h.b16 %v786
    %v1545 = vunpack.c.l.b16 %v787
    %v1546 = vunpack.c.h.b16 %v787
    %v1547 = vunpack.c.l.b16 %v788
    %v1548 = vunpack.c.h.b16 %v788
    %v1549 = vunpack.c.l.b16 %v789
    %v1550 = vunpack.c.h.b16 %v789
    %v1551 = vunpack.c.l.b16 %v790
    %v1552 = vunpack.c.h.b16 %v790
    %v1553 = vunpack.c.l.b16 %v791
    %v1554 = vunpack.c.h.b16 %v791
    %v1555 = vunpack.c.l.b16 %v792
    %v1556 = vunpack.c.h.b16 %v792
    %v1557 = vunpack.c.l.b16 %v793
    %v1558 = vunpack.c.h.b16 %v793
    %v1559 = vunpack.c.l.b16 %v794
    %v1560 = vunpack.c.h.b16 %v794
    %v1561 = vunpack.c.l.b16 %v795
    %v1562 = vunpack.c.h.b16 %v795
    %v1563 = vunpack.c.l.b16 %v796
    %v1564 = vunpack.c.h.b16 %v796
    %v1565 = vpack.c.b16 %v1057, %v1053
    %v1566 = vpack.c.b16 %v1058, %v1054
    %v1567 = vpack.c.b16 %v1059, %v1055
    %v1568 = vpack.c.b16 %v1060, %v1056
    %v1569 = vpack.c.b16 %v1065, %v1061
    %v1570 = vpack.c.b16 %v1066, %v1062
    %v1571 = vpack.c.b16 %v1067, %v1063
    %v1572 = vpack.c.b16 %v1068, %v1064
    %v1573 = vpack.c.b16 %v1073, %v1069
    %v1574 = vpack.c.b16 %v1074, %v1070
    %v1575 = vpack.c.b16 %v1075, %v1071
    %v1576 = vpack.c.b16 %v1076, %v1072
    %v1577 = vpack.c.b16 %v1081, %v1077
    %v1578 = vpack.c.b16 %v1082, %v1078
    %v1579 = vpack.c.b16 %v1083, %v1079
    %v1580 = vpack.c.b16 %v1084, %v1080
    %v1581 = vpack.c.b16 %v1089, %v1085
    %v1582 = vpack.c.b16 %v1090, %v1086
    %v1583 = vpack.c.b16 %v1091, %v1087
    %v1584 = vpack.c.b16 %v1092, %v1088
    %v1585 = vpack.c.b16 %v1097, %v1093
    %v1586 = vpack.c.b16 %v1098, %v1094
    %v1587 = vpack.c.b16 %v1099, %v1095
    %v1588 = vpack.c.b16 %v1100, %v1096
    %v1589 = vpack.c.b16 %v1105, %v1101
    %v1590 = vpack.c.b16 %v1106, %v1102
    %v1591 = vpack.c.b16 %v1107, %v1103
    %v1592 = vpack.c.b16 %v1108, %v1104
    %v1593 = vpack.c.b16 %v1113, %v1109
    %v1594 = vpack.c.b16 %v1114, %v1110
    %v1595 = vpack.c.b16 %v1115, %v1111
    %v1596 = vpack.c.b16 %v1116, %v1112
    %v1597 = vpack.c.b16 %v1121, %v1117
    %v1598 = vpack.c.b16 %v1122, %v1118
    %v1599 = vpack.c.b16 %v1123, %v1119
    %v1600 = vpack.c.b16 %v1124, %v1120
    %v1601 = vpack.c.b16 %v1129, %v1125
    %v1602 = vpack.c.b16 %v1130, %v1126
    %v1603 = vpack.c.b16 %v1131, %v1127
    %v1604 = vpack.c.b16 %v1132, %v1128
    %v1605 = vpack.c.b16 %v1137, %v1133
    %v1606 = vpack.c.b16 %v1138, %v1134
    %v1607 = vpack.c.b16 %v1139, %v1135
    %v1608 = vpack.c.b16 %v1140, %v1136
    %v1609 = vpack.c.b16 %v1145, %v1141
    %v1610 = vpack.c.b16 %v1146, %v1142
    %v1611 = vpack.c.b16 %v1147, %v1143
    %v1612 = vpack.c.b16 %v1148, %v1144
    %v1613 = vpack.c.b16 %v1153, %v1149
    %v1614 = vpack.c.b16 %v1154, %v1150
    %v1615 = vpack.c.b16 %v1155, %v1151
    %v1616 = vpack.c.b16 %v1156, %v1152
    %v1617 = vpack.c.b16 %v1161, %v1157
    %v1618 = vpack.c.b16 %v1162, %v1158
    %v1619 = vpack.c.b16 %v1163, %v1159
    %v1620 = vpack.c.b16 %v1164, %v1160
    %v1621 = vpack.c.b16 %v1169, %v1165
    %v1622 = vpack.c.b16 %v1170, %v1166
    %v1623 = vpack.c.b16 %v1171, %v1167
    %v1624 = vpack.c.b16 %v1172, %v1168
    %v1625 = vpack.c.b16 %v1177, %v1173
    %v1626 = vpack.c.b16 %v1178, %v1174
    %v1627 = vpack.c.b16 %v1179, %v1175
    %v1628 = vpack.c.b16 %v1180, %v1176
    %v1629 = vpack.c.b16 %v1185, %v1181
    %v1630 = vpack.c.b16 %v1186, %v1182
    %v1631 = vpack.c.b16 %v1187, %v1183
    %v1632 = vpack.c.b16 %v1188, %v1184
    %v1633 = vpack.c.b16 %v1193, %v1189
    %v1634 = vpack.c.b16 %v1194, %v1190
    %v1635 = vpack.c.b16 %v1195, %v1191
    %v1636 = vpack.c.b16 %v1196, %v1192
    %v1637 = vpack.c.b16 %v1201, %v1197
    %v1638 = vpack.c.b16 %v1202, %v1198
    %v1639 = vpack.c.b16 %v1203, %v1199
    %v1640 = vpack.c.b16 %v1204, %v1200
    %v1641 = vpack.c.b16 %v1209, %v1205
    %v1642 = vpack.c.b16 %v1210, %v1206
    %v1643 = vpack.c.b16 %v1211, %v1207
    %v1644 = vpack.c.b16 %v1212, %v1208
    %v1645 = vpack.c.b16 %v1217, %v1213
    %v1646 = vpack.c.b16 %v1218, %v1214
    %v1647 = vpack.c.b16 %v1219, %v1215
    %v1648 = vpack.c.b16 %v1220, %v1216
    %v1649 = vpack.c.b16 %v1225, %v1221
    %v1650 = vpack.c.b16 %v1226, %v1222
    %v1651 = vpack.c.b16 %v1227, %v1223
    %v1652 = vpack.c.b16 %v1228, %v1224
    %v1653 = vpack.c.b16 %v1233, %v1229
    %v1654 = vpack.c.b16 %v1234, %v1230
    %v1655 = vpack.c.b16 %v1235, %v1231
    %v1656 = vpack.c.b16 %v1236, %v1232
    %v1657 = vpack.c.b16 %v1241, %v1237
    %v1658 = vpack.c.b16 %v1242, %v1238
    %v1659 = vpack.c.b16 %v1243, %v1239
    %v1660 = vpack.c.b16 %v1244, %v1240
    %v1661 = vpack.c.b16 %v1249, %v1245
    %v1662 = vpack.c.b16 %v1250, %v1246
    %v1663 = vpack.c.b16 %v1251, %v1247
    %v1664 = vpack.c.b16 %v1252, %v1248
    %v1665 = vpack.c.b16 %v1257, %v1253
    %v1666 = vpack.c.b16 %v1258, %v1254
    %v1667 = vpack.c.b16 %v1259, %v1255
    %v1668 = vpack.c.b16 %v1260, %v1256
    %v1669 = vpack.c.b16 %v1265, %v1261
    %v1670 = vpack.c.b16 %v1266, %v1262
    %v1671 = vpack.c.b16 %v1267, %v1263
    %v1672 = vpack.c.b16 %v1268, %v1264
    %v1673 = vpack.c.b16 %v1273, %v1269
    %v1674 = vpack.c.b16 %v1274, %v1270
    %v1675 = vpack.c.b16 %v1275, %v1271
    %v1676 = vpack.c.b16 %v1276, %v1272
    %v1677 = vpack.c.b16 %v1281, %v1277
    %v1678 = vpack.c.b16 %v1282, %v1278
    %v1679 = vpack.c.b16 %v1283, %v1279
    %v1680 = vpack.c.b16 %v1284, %v1280
    %v1681 = vpack.c.b16 %v1289, %v1285
    %v1682 = vpack.c.b16 %v1290, %v1286
    %v1683 = vpack.c.b16 %v1291, %v1287
    %v1684 = vpack.c.b16 %v1292, %v1288
    %v1685 = vpack.c.b16 %v1297, %v1293
    %v1686 = vpack.c.b16 %v1298, %v1294
    %v1687 = vpack.c.b16 %v1299, %v1295
    %v1688 = vpack.c.b16 %v1300, %v1296
    %v1689 = vpack.c.b16 %v1305, %v1301
    %v1690 = vpack.c.b16 %v1306, %v1302
    %v1691 = vpack.c.b16 %v1307, %v1303
    %v1692 = vpack.c.b16 %v1308, %v1304
    %v1693 = vpack.c.b16 %v1313, %v1309
    %v1694 = vpack.c.b16 %v1314, %v1310
    %v1695 = vpack.c.b16 %v1315, %v1311
    %v1696 = vpack.c.b16 %v1316, %v1312
    %v1697 = vpack.c.b16 %v1321, %v1317
    %v1698 = vpack.c.b16 %v1322, %v1318
    %v1699 = vpack.c.b16 %v1323, %v1319
    %v1700 = vpack.c.b16 %v1324, %v1320
    %v1701 = vpack.c.b16 %v1329, %v1325
    %v1702 = vpack.c.b16 %v1330, %v1326
    %v1703 = vpack.c.b16 %v1331, %v1327
    %v1704 = vpack.c.b16 %v1332, %v1328
    %v1705 = vpack.c.b16 %v1337, %v1333
    %v1706 = vpack.c.b16 %v1338, %v1334
    %v1707 = vpack.c.b16 %v1339, %v1335
    %v1708 = vpack.c.b16 %v1340, %v1336
    %v1709 = vpack.c.b16 %v1345, %v1341
    %v1710 = vpack.c.b16 %v1346, %v1342
    %v1711 = vpack.c.b16 %v1347, %v1343
    %v1712 = vpack.c.b16 %v1348, %v1344
    %v1713 = vpack.c.b16 %v1353, %v1349
    %v1714 = vpack.c.b16 %v1354, %v1350
    %v1715 = vpack.c.b16 %v1355, %v1351
    %v1716 = vpack.c.b16 %v1356, %v1352
    %v1717 = vpack.c.b16 %v1361, %v1357
    %v1718 = vpack.c.b16 %v1362, %v1358
    %v1719 = vpack.c.b16 %v1363, %v1359
    %v1720 = vpack.c.b16 %v1364, %v1360
    %v1721 = vpack.c.b16 %v1369, %v1365
    %v1722 = vpack.c.b16 %v1370, %v1366
    %v1723 = vpack.c.b16 %v1371, %v1367
    %v1724 = vpack.c.b16 %v1372, %v1368
    %v1725 = vpack.c.b16 %v1377, %v1373
    %v1726 = vpack.c.b16 %v1378, %v1374
    %v1727 = vpack.c.b16 %v1379, %v1375
    %v1728 = vpack.c.b16 %v1380, %v1376
    %v1729 = vpack.c.b16 %v1385, %v1381
    %v1730 = vpack.c.b16 %v1386, %v1382
    %v1731 = vpack.c.b16 %v1387, %v1383
    %v1732 = vpack.c.b16 %v1388, %v1384
    %v1733 = vpack.c.b16 %v1393, %v1389
    %v1734 = vpack.c.b16 %v1394, %v1390
    %v1735 = vpack.c.b16 %v1395, %v1391
    %v1736 = vpack.c.b16 %v1396, %v1392
    %v1737 = vpack.c.b16 %v1401, %v1397
    %v1738 = vpack.c.b16 %v1402, %v1398
    %v1739 = vpack.c.b16 %v1403, %v1399
    %v1740 = vpack.c.b16 %v1404, %v1400
    %v1741 = vpack.c.b16 %v1409, %v1405
    %v1742 = vpack.c.b16 %v1410, %v1406
    %v1743 = vpack.c.b16 %v1411, %v1407
    %v1744 = vpack.c.b16 %v1412, %v1408
    %v1745 = vpack.c.b16 %v1417, %v1413
    %v1746 = vpack.c.b16 %v1418, %v1414
    %v1747 = vpack.c.b16 %v1419, %v1415
    %v1748 = vpack.c.b16 %v1420, %v1416
    %v1749 = vpack.c.b16 %v1425, %v1421
    %v1750 = vpack.c.b16 %v1426, %v1422
    %v1751 = vpack.c.b16 %v1427, %v1423
    %v1752 = vpack.c.b16 %v1428, %v1424
    %v1753 = vpack.c.b16 %v1433, %v1429
    %v1754 = vpack.c.b16 %v1434, %v1430
    %v1755 = vpack.c.b16 %v1435, %v1431
    %v1756 = vpack.c.b16 %v1436, %v1432
    %v1757 = vpack.c.b16 %v1441, %v1437
    %v1758 = vpack.c.b16 %v1442, %v1438
    %v1759 = vpack.c.b16 %v1443, %v1439
    %v1760 = vpack.c.b16 %v1444, %v1440
    %v1761 = vpack.c.b16 %v1449, %v1445
    %v1762 = vpack.c.b16 %v1450, %v1446
    %v1763 = vpack.c.b16 %v1451, %v1447
    %v1764 = vpack.c.b16 %v1452, %v1448
    %v1765 = vpack.c.b16 %v1457, %v1453
    %v1766 = vpack.c.b16 %v1458, %v1454
    %v1767 = vpack.c.b16 %v1459, %v1455
    %v1768 = vpack.c.b16 %v1460, %v1456
    %v1769 = vpack.c.b16 %v1465, %v1461
    %v1770 = vpack.c.b16 %v1466, %v1462
    %v1771 = vpack.c.b16 %v1467, %v1463
    %v1772 = vpack.c.b16 %v1468, %v1464
    %v1773 = vpack.c.b16 %v1473, %v1469
    %v1774 = vpack.c.b16 %v1474, %v1470
    %v1775 = vpack.c.b16 %v1475, %v1471
    %v1776 = vpack.c.b16 %v1476, %v1472
    %v1777 = vpack.c.b16 %v1481, %v1477
    %v1778 = vpack.c.b16 %v1482, %v1478
    %v1779 = vpack.c.b16 %v1483, %v1479
    %v1780 = vpack.c.b16 %v1484, %v1480
    %v1781 = vpack.c.b16 %v1489, %v1485
    %v1782 = vpack.c.b16 %v1490, %v1486
    %v1783 = vpack.c.b16 %v1491, %v1487
    %v1784 = vpack.c.b16 %v1492, %v1488
    %v1785 = vpack.c.b16 %v1497, %v1493
    %v1786 = vpack.c.b16 %v1498, %v1494
    %v1787 = vpack.c.b16 %v1499, %v1495
    %v1788 = vpack.c.b16 %v1500, %v1496
    %v1789 = vpack.c.b16 %v1505, %v1501
    %v1790 = vpack.c.b16 %v1506, %v1502
    %v1791 = vpack.c.b16 %v1507, %v1503
    %v1792 = vpack.c.b16 %v1508, %v1504
    %v1793 = vpack.c.b16 %v1513, %v1509
    %v1794 = vpack.c.b16 %v1514, %v1510
    %v1795 = vpack.c.b16 %v1515, %v1511
    %v1796 = vpack.c.b16 %v1516, %v1512
    %v1797 = vpack.c.b16 %v1521, %v1517
    %v1798 = vpack.c.b16 %v1522, %v1518
    %v1799 = vpack.c.b16 %v1523, %v1519
    %v1800 = vpack.c.b16 %v1524, %v1520
    %v1801 = vpack.c.b16 %v1529, %v1525
    %v1802 = vpack.c.b16 %v1530, %v1526
    %v1803 = vpack.c.b16 %v1531, %v1527
    %v1804 = vpack.c.b16 %v1532, %v1528
    %v1805 = vpack.c.b16 %v1537, %v1533
    %v1806 = vpack.c.b16 %v1538, %v1534
    %v1807 = vpack.c.b16 %v1539, %v1535
    %v1808 = vpack.c.b16 %v1540, %v1536
    %v1809 = vpack.c.b16 %v1545, %v1541
    %v1810 = vpack.c.b16 %v1546, %v1542
    %v1811 = vpack.c.b16 %v1547, %v1543
    %v1812 = vpack.c.b16 %v1548, %v1544
    %v1813 = vpack.c.b16 %v1553, %v1549
    %v1814 = vpack.c.b16 %v1554, %v1550
    %v1815 = vpack.c.b16 %v1555, %v1551
    %v1816 = vpack.c.b16 %v1556, %v1552
    %v1817 = vpack.c.b16 %v1561, %v1557
    %v1818 = vpack.c.b16 %v1562, %v1558
    %v1819 = vpack.c.b16 %v1563, %v1559
    %v1820 = vpack.c.b16 %v1564, %v1560
    %2077 = vmatprep.subr.bf16.mxu0 %v1566
    %2078 = vmatpush1.bf16.msra.mxu0 %v1565
    %2079 = vmatprep.subr.bf16.mxu0 %v1570
    %2080 = vmatpush1.bf16.msra.mxu0 %v1569
    %2081 = vmatprep.subr.bf16.mxu0 %v1574
    %2082 = vmatpush1.bf16.msra.mxu0 %v1573
    %2083 = vmatprep.subr.bf16.mxu0 %v1578
    %2084 = vmatpush1.bf16.msra.mxu0 %v1577
    %2085 = vmatprep.subr.bf16.mxu0 %v1582
    %2086 = vmatpush1.bf16.msra.mxu0 %v1581
    %2087 = vmatprep.subr.bf16.mxu0 %v1586
    %2088 = vmatpush1.bf16.msra.mxu0 %v1585
    %2089 = vmatprep.subr.bf16.mxu0 %v1590
    %2090 = vmatpush1.bf16.msra.mxu0 %v1589
    %2091 = vmatprep.subr.bf16.mxu0 %v1594
    %2092 = vmatpush1.bf16.msra.mxu0 %v1593
    %2093 = vmatprep.subr.bf16.mxu0 %v1598
    %2094 = vmatpush1.bf16.msra.mxu0 %v1597
    %2095 = vmatprep.subr.bf16.mxu0 %v1602
    %2096 = vmatpush1.bf16.msra.mxu0 %v1601
    %2097 = vmatprep.subr.bf16.mxu0 %v1606
    %2098 = vmatpush1.bf16.msra.mxu0 %v1605
    %2099 = vmatprep.subr.bf16.mxu0 %v1610
    %2100 = vmatpush1.bf16.msra.mxu0 %v1609
    %2101 = vmatprep.subr.bf16.mxu0 %v1614
    %2102 = vmatpush1.bf16.msra.mxu0 %v1613
    %2103 = vmatprep.subr.bf16.mxu0 %v1618
    %2104 = vmatpush1.bf16.msra.mxu0 %v1617
    %2105 = vmatprep.subr.bf16.mxu0 %v1622
    %2106 = vmatpush1.bf16.msra.mxu0 %v1621
    %2107 = vmatprep.subr.bf16.mxu0 %v1626
    %2108 = vmatpush1.bf16.msra.mxu0 %v1625
    %2109 = vmatprep.mubr.bf16.mxu0 %v534
    %2110 = vmatmul.mubr.bf16.gmra.mrb[0].mxu0 %v533
    %v2111 = vpop.f32.mrb[0].mxu0
    %v2112 = vadd.f32 0.0, %v2111
    %v2113 = vpop.f32.mrb[0].mxu0
    %v2114 = vadd.f32 0.0, %v2113
    %v2115 = vpop.f32.mrb[0].mxu0
    %v2116 = vpop.f32.mrb[0].mxu0
    %2117 = vdwg.mxu0
    %2118 = vmatprep.subr.bf16.mxu0 %v1630
    %2119 = vmatpush1.bf16.msra.mxu0 %v1629
    %2120 = vmatprep.subr.bf16.mxu0 %v1634
    %2121 = vmatpush1.bf16.msra.mxu0 %v1633
    %2122 = vmatprep.subr.bf16.mxu0 %v1638
    %2123 = vmatpush1.bf16.msra.mxu0 %v1637
    %2124 = vmatprep.subr.bf16.mxu0 %v1642
    %2125 = vmatpush1.bf16.msra.mxu0 %v1641
    %2126 = vmatprep.subr.bf16.mxu0 %v1646
    %2127 = vmatpush1.bf16.msra.mxu0 %v1645
    %2128 = vmatprep.subr.bf16.mxu0 %v1650
    %2129 = vmatpush1.bf16.msra.mxu0 %v1649
    %2130 = vmatprep.subr.bf16.mxu0 %v1654
    %2131 = vmatpush1.bf16.msra.mxu0 %v1653
    %2132 = vmatprep.subr.bf16.mxu0 %v1658
    %2133 = vmatpush1.bf16.msra.mxu0 %v1657
    %2134 = vmatprep.subr.bf16.mxu0 %v1662
    %2135 = vmatpush1.bf16.msra.mxu0 %v1661
    %2136 = vmatprep.subr.bf16.mxu0 %v1666
    %2137 = vmatpush1.bf16.msra.mxu0 %v1665
    %2138 = vmatprep.subr.bf16.mxu0 %v1670
    %2139 = vmatpush1.bf16.msra.mxu0 %v1669
    %2140 = vmatprep.subr.bf16.mxu0 %v1674
    %2141 = vmatpush1.bf16.msra.mxu0 %v1673
    %2142 = vmatprep.subr.bf16.mxu0 %v1678
    %2143 = vmatpush1.bf16.msra.mxu0 %v1677
    %2144 = vmatprep.subr.bf16.mxu0 %v1682
    %2145 = vmatpush1.bf16.msra.mxu0 %v1681
    %2146 = vmatprep.subr.bf16.mxu0 %v1686
    %2147 = vmatpush1.bf16.msra.mxu0 %v1685
    %2148 = vmatprep.subr.bf16.mxu0 %v1690
    %2149 = vmatpush1.bf16.msra.mxu0 %v1689
    %2150 = vmatprep.mubr.bf16.mxu0 %v536
    %2151 = vmatmul.mubr.bf16.gmra.mrb[0].mxu0 %v535
    %v2152 = vpop.f32.mrb[0].mxu0
    %v2153 = vadd.f32 %v2112, %v2152
    %v2154 = vpop.f32.mrb[0].mxu0
    %v2155 = vadd.f32 %v2114, %v2154
    %v2156 = vpop.f32.mrb[0].mxu0
    %v2157 = vpop.f32.mrb[0].mxu0
    %2158 = vdwg.mxu0
    %2159 = vmatprep.subr.bf16.mxu0 %v1694
    %2160 = vmatpush1.bf16.msra.mxu0 %v1693
    %2161 = vmatprep.subr.bf16.mxu0 %v1698
    %2162 = vmatpush1.bf16.msra.mxu0 %v1697
    %2163 = vmatprep.subr.bf16.mxu0 %v1702
    %2164 = vmatpush1.bf16.msra.mxu0 %v1701
    %2165 = vmatprep.subr.bf16.mxu0 %v1706
    %2166 = vmatpush1.bf16.msra.mxu0 %v1705
    %2167 = vmatprep.subr.bf16.mxu0 %v1710
    %2168 = vmatpush1.bf16.msra.mxu0 %v1709
    %2169 = vmatprep.subr.bf16.mxu0 %v1714
    %2170 = vmatpush1.bf16.msra.mxu0 %v1713
    %2171 = vmatprep.subr.bf16.mxu0 %v1718
    %2172 = vmatpush1.bf16.msra.mxu0 %v1717
    %2173 = vmatprep.subr.bf16.mxu0 %v1722
    %2174 = vmatpush1.bf16.msra.mxu0 %v1721
    %2175 = vmatprep.subr.bf16.mxu0 %v1726
    %2176 = vmatpush1.bf16.msra.mxu0 %v1725
    %2177 = vmatprep.subr.bf16.mxu0 %v1730
    %2178 = vmatpush1.bf16.msra.mxu0 %v1729
    %2179 = vmatprep.subr.bf16.mxu0 %v1734
    %2180 = vmatpush1.bf16.msra.mxu0 %v1733
    %2181 = vmatprep.subr.bf16.mxu0 %v1738
    %2182 = vmatpush1.bf16.msra.mxu0 %v1737
    %2183 = vmatprep.subr.bf16.mxu0 %v1742
    %2184 = vmatpush1.bf16.msra.mxu0 %v1741
    %2185 = vmatprep.subr.bf16.mxu0 %v1746
    %2186 = vmatpush1.bf16.msra.mxu0 %v1745
    %2187 = vmatprep.subr.bf16.mxu0 %v1750
    %2188 = vmatpush1.bf16.msra.mxu0 %v1749
    %2189 = vmatprep.subr.bf16.mxu0 %v1754
    %2190 = vmatpush1.bf16.msra.mxu0 %v1753
    %2191 = vmatprep.mubr.bf16.mxu0 %v538
    %2192 = vmatmul.mubr.bf16.gmra.mrb[0].mxu0 %v537
    %v2193 = vpop.f32.mrb[0].mxu0
    %v2194 = vadd.f32 %v2153, %v2193
    %v2195 = vpop.f32.mrb[0].mxu0
    %v2196 = vadd.f32 %v2155, %v2195
    %v2197 = vpop.f32.mrb[0].mxu0
    %v2198 = vpop.f32.mrb[0].mxu0
    %2199 = vdwg.mxu0
    %2200 = vmatprep.subr.bf16.mxu0 %v1758
    %2201 = vmatpush1.bf16.msra.mxu0 %v1757
    %2202 = vmatprep.subr.bf16.mxu0 %v1762
    %2203 = vmatpush1.bf16.msra.mxu0 %v1761
    %2204 = vmatprep.subr.bf16.mxu0 %v1766
    %2205 = vmatpush1.bf16.msra.mxu0 %v1765
    %2206 = vmatprep.subr.bf16.mxu0 %v1770
    %2207 = vmatpush1.bf16.msra.mxu0 %v1769
    %2208 = vmatprep.subr.bf16.mxu0 %v1774
    %2209 = vmatpush1.bf16.msra.mxu0 %v1773
    %2210 = vmatprep.subr.bf16.mxu0 %v1778
    %2211 = vmatpush1.bf16.msra.mxu0 %v1777
    %2212 = vmatprep.subr.bf16.mxu0 %v1782
    %2213 = vmatpush1.bf16.msra.mxu0 %v1781
    %2214 = vmatprep.subr.bf16.mxu0 %v1786
    %2215 = vmatpush1.bf16.msra.mxu0 %v1785
    %2216 = vmatprep.subr.bf16.mxu0 %v1790
    %2217 = vmatpush1.bf16.msra.mxu0 %v1789
    %2218 = vmatprep.subr.bf16.mxu0 %v1794
    %2219 = vmatpush1.bf16.msra.mxu0 %v1793
    %2220 = vmatprep.subr.bf16.mxu0 %v1798
    %2221 = vmatpush1.bf16.msra.mxu0 %v1797
    %2222 = vmatprep.subr.bf16.mxu0 %v1802
    %2223 = vmatpush1.bf16.msra.mxu0 %v1801
    %2224 = vmatprep.subr.bf16.mxu0 %v1806
    %2225 = vmatpush1.bf16.msra.mxu0 %v1805
    %2226 = vmatprep.subr.bf16.mxu0 %v1810
    %2227 = vmatpush1.bf16.msra.mxu0 %v1809
    %2228 = vmatprep.subr.bf16.mxu0 %v1814
    %2229 = vmatpush1.bf16.msra.mxu0 %v1813
    %2230 = vmatprep.subr.bf16.mxu0 %v1818
    %2231 = vmatpush1.bf16.msra.mxu0 %v1817
    %2232 = vmatprep.mubr.bf16.mxu0 %v540
    %2233 = vmatmul.mubr.bf16.gmra.mrb[0].mxu0 %v539
    %v2234 = vpop.f32.mrb[0].mxu0
    %v2235 = vadd.f32 %v2194, %v2234
    %v2236 = vpop.f32.mrb[0].mxu0
    %v2237 = vadd.f32 %v2196, %v2236
    %v2238 = vpop.f32.mrb[0].mxu0
    %v2239 = vpop.f32.mrb[0].mxu0
    %2240 = vdwg.mxu0
    %2241 = vmatprep.subr.bf16.mxu0 %v1568
    %2242 = vmatpush1.bf16.msra.mxu0 %v1567
    %2243 = vmatprep.subr.bf16.mxu0 %v1572
    %2244 = vmatpush1.bf16.msra.mxu0 %v1571
    %2245 = vmatprep.subr.bf16.mxu0 %v1576
    %2246 = vmatpush1.bf16.msra.mxu0 %v1575
    %2247 = vmatprep.subr.bf16.mxu0 %v1580
    %2248 = vmatpush1.bf16.msra.mxu0 %v1579
    %2249 = vmatprep.subr.bf16.mxu0 %v1584
    %2250 = vmatpush1.bf16.msra.mxu0 %v1583
    %2251 = vmatprep.subr.bf16.mxu0 %v1588
    %2252 = vmatpush1.bf16.msra.mxu0 %v1587
    %2253 = vmatprep.subr.bf16.mxu0 %v1592
    %2254 = vmatpush1.bf16.msra.mxu0 %v1591
    %2255 = vmatprep.subr.bf16.mxu0 %v1596
    %2256 = vmatpush1.bf16.msra.mxu0 %v1595
    %2257 = vmatprep.subr.bf16.mxu0 %v1600
    %2258 = vmatpush1.bf16.msra.mxu0 %v1599
    %2259 = vmatprep.subr.bf16.mxu0 %v1604
    %2260 = vmatpush1.bf16.msra.mxu0 %v1603
    %2261 = vmatprep.subr.bf16.mxu0 %v1608
    %2262 = vmatpush1.bf16.msra.mxu0 %v1607
    %2263 = vmatprep.subr.bf16.mxu0 %v1612
    %2264 = vmatpush1.bf16.msra.mxu0 %v1611
    %2265 = vmatprep.subr.bf16.mxu0 %v1616
    %2266 = vmatpush1.bf16.msra.mxu0 %v1615
    %2267 = vmatprep.subr.bf16.mxu0 %v1620
    %2268 = vmatpush1.bf16.msra.mxu0 %v1619
    %2269 = vmatprep.subr.bf16.mxu0 %v1624
    %2270 = vmatpush1.bf16.msra.mxu0 %v1623
    %2271 = vmatprep.subr.bf16.mxu0 %v1628
    %2272 = vmatpush1.bf16.msra.mxu0 %v1627
    %2273 = vmatprep.mubr.bf16.mxu0 %v534
    %2274 = vmatmul.mubr.bf16.gmra.mrb[0].mxu0 %v533
    %v2275 = vpop.f32.mrb[0].mxu0
    %v2276 = vadd.f32 0.0, %v2275
    %v2277 = vpop.f32.mrb[0].mxu0
    %v2278 = vadd.f32 0.0, %v2277
    %v2279 = vpop.f32.mrb[0].mxu0
    %v2280 = vpop.f32.mrb[0].mxu0
    %2281 = vdwg.mxu0
    %2282 = vmatprep.subr.bf16.mxu0 %v1632
    %2283 = vmatpush1.bf16.msra.mxu0 %v1631
    %2284 = vmatprep.subr.bf16.mxu0 %v1636
    %2285 = vmatpush1.bf16.msra.mxu0 %v1635
    %2286 = vmatprep.subr.bf16.mxu0 %v1640
    %2287 = vmatpush1.bf16.msra.mxu0 %v1639
    %2288 = vmatprep.subr.bf16.mxu0 %v1644
    %2289 = vmatpush1.bf16.msra.mxu0 %v1643
    %2290 = vmatprep.subr.bf16.mxu0 %v1648
    %2291 = vmatpush1.bf16.msra.mxu0 %v1647
    %2292 = vmatprep.subr.bf16.mxu0 %v1652
    %2293 = vmatpush1.bf16.msra.mxu0 %v1651
    %2294 = vmatprep.subr.bf16.mxu0 %v1656
    %2295 = vmatpush1.bf16.msra.mxu0 %v1655
    %2296 = vmatprep.subr.bf16.mxu0 %v1660
    %2297 = vmatpush1.bf16.msra.mxu0 %v1659
    %2298 = vmatprep.subr.bf16.mxu0 %v1664
    %2299 = vmatpush1.bf16.msra.mxu0 %v1663
    %2300 = vmatprep.subr.bf16.mxu0 %v1668
    %2301 = vmatpush1.bf16.msra.mxu0 %v1667
    %2302 = vmatprep.subr.bf16.mxu0 %v1672
    %2303 = vmatpush1.bf16.msra.mxu0 %v1671
    %2304 = vmatprep.subr.bf16.mxu0 %v1676
    %2305 = vmatpush1.bf16.msra.mxu0 %v1675
    %2306 = vmatprep.subr.bf16.mxu0 %v1680
    %2307 = vmatpush1.bf16.msra.mxu0 %v1679
    %2308 = vmatprep.subr.bf16.mxu0 %v1684
    %2309 = vmatpush1.bf16.msra.mxu0 %v1683
    %2310 = vmatprep.subr.bf16.mxu0 %v1688
    %2311 = vmatpush1.bf16.msra.mxu0 %v1687
    %2312 = vmatprep.subr.bf16.mxu0 %v1692
    %2313 = vmatpush1.bf16.msra.mxu0 %v1691
    %2314 = vmatprep.mubr.bf16.mxu0 %v536
    %2315 = vmatmul.mubr.bf16.gmra.mrb[0].mxu0 %v535
    %v2316 = vpop.f32.mrb[0].mxu0
    %v2317 = vadd.f32 %v2276, %v2316
    %v2318 = vpop.f32.mrb[0].mxu0
    %v2319 = vadd.f32 %v2278, %v2318
    %v2320 = vpop.f32.mrb[0].mxu0
    %v2321 = vpop.f32.mrb[0].mxu0
    %2322 = vdwg.mxu0
    %2323 = vmatprep.subr.bf16.mxu0 %v1696
    %2324 = vmatpush1.bf16.msra.mxu0 %v1695
    %2325 = vmatprep.subr.bf16.mxu0 %v1700
    %2326 = vmatpush1.bf16.msra.mxu0 %v1699
    %2327 = vmatprep.subr.bf16.mxu0 %v1704
    %2328 = vmatpush1.bf16.msra.mxu0 %v1703
    %2329 = vmatprep.subr.bf16.mxu0 %v1708
    %2330 = vmatpush1.bf16.msra.mxu0 %v1707
    %2331 = vmatprep.subr.bf16.mxu0 %v1712
    %2332 = vmatpush1.bf16.msra.mxu0 %v1711
    %2333 = vmatprep.subr.bf16.mxu0 %v1716
    %2334 = vmatpush1.bf16.msra.mxu0 %v1715
    %2335 = vmatprep.subr.bf16.mxu0 %v1720
    %2336 = vmatpush1.bf16.msra.mxu0 %v1719
    %2337 = vmatprep.subr.bf16.mxu0 %v1724
    %2338 = vmatpush1.bf16.msra.mxu0 %v1723
    %2339 = vmatprep.subr.bf16.mxu0 %v1728
    %2340 = vmatpush1.bf16.msra.mxu0 %v1727
    %2341 = vmatprep.subr.bf16.mxu0 %v1732
    %2342 = vmatpush1.bf16.msra.mxu0 %v1731
    %2343 = vmatprep.subr.bf16.mxu0 %v1736
    %2344 = vmatpush1.bf16.msra.mxu0 %v1735
    %2345 = vmatprep.subr.bf16.mxu0 %v1740
    %2346 = vmatpush1.bf16.msra.mxu0 %v1739
    %2347 = vmatprep.subr.bf16.mxu0 %v1744
    %2348 = vmatpush1.bf16.msra.mxu0 %v1743
    %2349 = vmatprep.subr.bf16.mxu0 %v1748
    %2350 = vmatpush1.bf16.msra.mxu0 %v1747
    %2351 = vmatprep.subr.bf16.mxu0 %v1752
    %2352 = vmatpush1.bf16.msra.mxu0 %v1751
    %2353 = vmatprep.subr.bf16.mxu0 %v1756
    %2354 = vmatpush1.bf16.msra.mxu0 %v1755
    %2355 = vmatprep.mubr.bf16.mxu0 %v538
    %2356 = vmatmul.mubr.bf16.gmra.mrb[0].mxu0 %v537
    %v2357 = vpop.f32.mrb[0].mxu0
    %v2358 = vadd.f32 %v2317, %v2357
    %v2359 = vpop.f32.mrb[0].mxu0
    %v2360 = vadd.f32 %v2319, %v2359
    %v2361 = vpop.f32.mrb[0].mxu0
    %v2362 = vpop.f32.mrb[0].mxu0
    %2363 = vdwg.mxu0
    %2364 = vmatprep.subr.bf16.mxu0 %v1760
    %2365 = vmatpush1.bf16.msra.mxu0 %v1759
    %2366 = vmatprep.subr.bf16.mxu0 %v1764
    %2367 = vmatpush1.bf16.msra.mxu0 %v1763
    %2368 = vmatprep.subr.bf16.mxu0 %v1768
    %2369 = vmatpush1.bf16.msra.mxu0 %v1767
    %2370 = vmatprep.subr.bf16.mxu0 %v1772
    %2371 = vmatpush1.bf16.msra.mxu0 %v1771
    %2372 = vmatprep.subr.bf16.mxu0 %v1776
    %2373 = vmatpush1.bf16.msra.mxu0 %v1775
    %2374 = vmatprep.subr.bf16.mxu0 %v1780
    %2375 = vmatpush1.bf16.msra.mxu0 %v1779
    %2376 = vmatprep.subr.bf16.mxu0 %v1784
    %2377 = vmatpush1.bf16.msra.mxu0 %v1783
    %2378 = vmatprep.subr.bf16.mxu0 %v1788
    %2379 = vmatpush1.bf16.msra.mxu0 %v1787
    %2380 = vmatprep.subr.bf16.mxu0 %v1792
    %2381 = vmatpush1.bf16.msra.mxu0 %v1791
    %2382 = vmatprep.subr.bf16.mxu0 %v1796
    %2383 = vmatpush1.bf16.msra.mxu0 %v1795
    %2384 = vmatprep.subr.bf16.mxu0 %v1800
    %2385 = vmatpush1.bf16.msra.mxu0 %v1799
    %2386 = vmatprep.subr.bf16.mxu0 %v1804
    %2387 = vmatpush1.bf16.msra.mxu0 %v1803
    %2388 = vmatprep.subr.bf16.mxu0 %v1808
    %2389 = vmatpush1.bf16.msra.mxu0 %v1807
    %2390 = vmatprep.subr.bf16.mxu0 %v1812
    %2391 = vmatpush1.bf16.msra.mxu0 %v1811
    %2392 = vmatprep.subr.bf16.mxu0 %v1816
    %2393 = vmatpush1.bf16.msra.mxu0 %v1815
    %2394 = vmatprep.subr.bf16.mxu0 %v1820
    %2395 = vmatpush1.bf16.msra.mxu0 %v1819
    %2396 = vmatprep.mubr.bf16.mxu0 %v540
    %2397 = vmatmul.mubr.bf16.gmra.mrb[0].mxu0 %v539
    %v2398 = vpop.f32.mrb[0].mxu0
    %v2399 = vadd.f32 %v2358, %v2398
    %v2400 = vpop.f32.mrb[0].mxu0
    %v2401 = vadd.f32 %v2360, %v2400
    %v2402 = vpop.f32.mrb[0].mxu0
    %v2403 = vpop.f32.mrb[0].mxu0
    %2404 = vdwg.mxu0
    %v2405 = vpack.c.bf16 %v2235, %v2235
    %v2406 = vpack.c.bf16 %v2237, %v2237
    %v2407 = vpack.c.bf16 %v2399, %v2399
    %v2408 = vpack.c.bf16 %v2401, %v2401
    %v2409 = vld [vmem:[%s4] sm:$0xf]
    %v2412 = vunpack.c.l.s4 1966171168
    %v2413 = vunpack.c.0.s8 %v2412
    %v2414 = vlaneseq
    %v2415 = vshrl.u32 %v2414, 7
    %v2416 = vsub.s32 %v2413, %v2415
    %v2417 = vrot.slane %v2409, %v2416
    %v2418 = vcombine.high %v2417, %v2417
    %v2420 = vunpack.c.l.s4 1966171168
    %v2421 = vunpack.c.0.s8 %v2420
    %v2422 = vlaneseq
    %v2423 = vshrl.u32 %v2422, 7
    %v2424 = vsub.s32 %v2421, %v2423
    %v2425 = vrot.slane %v2417, %v2424
    %v2427 = vunpack.c.l.s4 1966171168
    %v2428 = vunpack.c.0.s8 %v2427
    %v2429 = vlaneseq
    %v2430 = vshrl.u32 %v2429, 7
    %v2431 = vsub.s32 %v2428, %v2430
    %v2432 = vrot.slane %v2418, %v2431
    %v2433 = vcombine.high %v2425, %v2425
    %v2434 = vcombine.high %v2432, %v2432
    %v2436 = vpack.i.b16 %v2425, %v2425
    %v2438 = vlaneseq
    %v2439 = vshrl.u32 %v2438, 7
    %v2440 = vsub.s32 0, %v2439
    %v2441 = vrot.slane %v2436, %v2440
    %v2443 = vpack.i.b16 %v2432, %v2432
    %v2445 = vlaneseq
    %v2446 = vshrl.u32 %v2445, 7
    %v2447 = vsub.s32 0, %v2446
    %v2448 = vrot.slane %v2443, %v2447
    %v2450 = vpack.i.b16 %v2433, %v2433
    %v2452 = vlaneseq
    %v2453 = vshrl.u32 %v2452, 7
    %v2454 = vsub.s32 0, %v2453
    %v2455 = vrot.slane %v2450, %v2454
    %v2457 = vpack.i.b16 %v2434, %v2434
    %v2459 = vlaneseq
    %v2460 = vshrl.u32 %v2459, 7
    %v2461 = vsub.s32 0, %v2460
    %v2462 = vrot.slane %v2457, %v2461
    %v2463 = vadd.bf16 %v2405, %v2441
    %v2464 = vadd.bf16 %v2406, %v2448
    %v2465 = vadd.bf16 %v2407, %v2455
    %v2466 = vadd.bf16 %v2408, %v2462
    %v2467 = vmax.bf16 %v2463, 0
    %v2468 = vmax.bf16 %v2464, 0
    %v2469 = vmax.bf16 %v2465, 0
    %v2470 = vmax.bf16 %v2466, 0
    %v2471 = vld [vmem:[#allocation9] sm:$0xf]
    %v2472 = vld [vmem:[#allocation9 + $0x4] sm:$0xf]
    %v2473 = vld [vmem:[#allocation9 + $0x8] sm:$0xf]
    %v2474 = vld [vmem:[#allocation9 + $0xc] sm:$0xf]
    %v2475 = vld [vmem:[#allocation9 + $0x10] sm:$0xf]
    %v2476 = vld [vmem:[#allocation9 + $0x14] sm:$0xf]
    %v2477 = vld [vmem:[#allocation9 + $0x18] sm:$0xf]
    %v2478 = vld [vmem:[#allocation9 + $0x1c] sm:$0xf]
    %v2479 = vld [vmem:[#allocation9 + $0x20] sm:$0xf]
    %v2480 = vld [vmem:[#allocation9 + $0x24] sm:$0xf]
    %v2481 = vld [vmem:[#allocation9 + $0x28] sm:$0xf]
    %v2482 = vld [vmem:[#allocation9 + $0x2c] sm:$0xf]
    %v2483 = vld [vmem:[#allocation9 + $0x30] sm:$0xf]
    %v2484 = vld [vmem:[#allocation9 + $0x34] sm:$0xf]
    %v2485 = vld [vmem:[#allocation9 + $0x38] sm:$0xf]
    %v2486 = vld [vmem:[#allocation9 + $0x3c] sm:$0xf]
    %v2487 = vld [vmem:[#allocation9 + $0x40] sm:$0xf]
    %v2488 = vld [vmem:[#allocation9 + $0x44] sm:$0xf]
    %v2489 = vld [vmem:[#allocation9 + $0x48] sm:$0xf]
    %v2490 = vld [vmem:[#allocation9 + $0x4c] sm:$0xf]
    %v2491 = vld [vmem:[#allocation9 + $0x50] sm:$0xf]
    %v2492 = vld [vmem:[#allocation9 + $0x54] sm:$0xf]
    %v2493 = vld [vmem:[#allocation9 + $0x58] sm:$0xf]
    %v2494 = vld [vmem:[#allocation9 + $0x5c] sm:$0xf]
    %v2495 = vld [vmem:[#allocation9 + $0x60] sm:$0xf]
    %v2496 = vld [vmem:[#allocation9 + $0x64] sm:$0xf]
    %v2497 = vld [vmem:[#allocation9 + $0x68] sm:$0xf]
    %v2498 = vld [vmem:[#allocation9 + $0x6c] sm:$0xf]
    %v2499 = vld [vmem:[#allocation9 + $0x70] sm:$0xf]
    %v2500 = vld [vmem:[#allocation9 + $0x74] sm:$0xf]
    %v2501 = vld [vmem:[#allocation9 + $0x78] sm:$0xf]
    %v2502 = vld [vmem:[#allocation9 + $0x7c] sm:$0xf]
    %v2503 = vld [vmem:[#allocation9 + $0x80] sm:$0xf]
    %v2504 = vld [vmem:[#allocation9 + $0x84] sm:$0xf]
    %v2505 = vld [vmem:[#allocation9 + $0x88] sm:$0xf]
    %v2506 = vld [vmem:[#allocation9 + $0x8c] sm:$0xf]
    %v2507 = vld [vmem:[#allocation9 + $0x90] sm:$0xf]
    %v2508 = vld [vmem:[#allocation9 + $0x94] sm:$0xf]
    %v2509 = vld [vmem:[#allocation9 + $0x98] sm:$0xf]
    %v2510 = vld [vmem:[#allocation9 + $0x9c] sm:$0xf]
    %v2511 = vld [vmem:[#allocation9 + $0xa0] sm:$0xf]
    %v2512 = vld [vmem:[#allocation9 + $0xa4] sm:$0xf]
    %v2513 = vld [vmem:[#allocation9 + $0xa8] sm:$0xf]
    %v2514 = vld [vmem:[#allocation9 + $0xac] sm:$0xf]
    %v2515 = vld [vmem:[#allocation9 + $0xb0] sm:$0xf]
    %v2516 = vld [vmem:[#allocation9 + $0xb4] sm:$0xf]
    %v2517 = vld [vmem:[#allocation9 + $0xb8] sm:$0xf]
    %v2518 = vld [vmem:[#allocation9 + $0xbc] sm:$0xf]
    %v2519 = vld [vmem:[#allocation9 + $0xc0] sm:$0xf]
    %v2520 = vld [vmem:[#allocation9 + $0xc4] sm:$0xf]
    %v2521 = vld [vmem:[#allocation9 + $0xc8] sm:$0xf]
    %v2522 = vld [vmem:[#allocation9 + $0xcc] sm:$0xf]
    %v2523 = vld [vmem:[#allocation9 + $0xd0] sm:$0xf]
    %v2524 = vld [vmem:[#allocation9 + $0xd4] sm:$0xf]
    %v2525 = vld [vmem:[#allocation9 + $0xd8] sm:$0xf]
    %v2526 = vld [vmem:[#allocation9 + $0xdc] sm:$0xf]
    %v2527 = vld [vmem:[#allocation9 + $0xe0] sm:$0xf]
    %v2528 = vld [vmem:[#allocation9 + $0xe4] sm:$0xf]
    %v2529 = vld [vmem:[#allocation9 + $0xe8] sm:$0xf]
    %v2530 = vld [vmem:[#allocation9 + $0xec] sm:$0xf]
    %v2531 = vld [vmem:[#allocation9 + $0xf0] sm:$0xf]
    %v2532 = vld [vmem:[#allocation9 + $0xf4] sm:$0xf]
    %v2533 = vld [vmem:[#allocation9 + $0xf8] sm:$0xf]
    %v2534 = vld [vmem:[#allocation9 + $0xfc] sm:$0xf]
    %v2535 = vld [vmem:[%s6] sm:$0x1]
    %v2537 = vlaneseq
    %v2538 = vshrl.u32 %v2537, 7
    %v2539 = vsub.s32 0, %v2538
    %v2540 = vrot.slane %v2535, %v2539
    %v2606 = vunpack.c.l.b16 %v2471
    %v2607 = vunpack.c.l.b16 %v2472
    %v2608 = vunpack.c.l.b16 %v2473
    %v2609 = vunpack.c.l.b16 %v2474
    %v2610 = vunpack.c.l.b16 %v2475
    %v2611 = vunpack.c.l.b16 %v2476
    %v2612 = vunpack.c.l.b16 %v2477
    %v2613 = vunpack.c.l.b16 %v2478
    %v2614 = vunpack.c.l.b16 %v2479
    %v2615 = vunpack.c.l.b16 %v2480
    %v2616 = vunpack.c.l.b16 %v2481
    %v2617 = vunpack.c.l.b16 %v2482
    %v2618 = vunpack.c.l.b16 %v2483
    %v2619 = vunpack.c.l.b16 %v2484
    %v2620 = vunpack.c.l.b16 %v2485
    %v2621 = vunpack.c.l.b16 %v2486
    %v2622 = vunpack.c.l.b16 %v2487
    %v2623 = vunpack.c.l.b16 %v2488
    %v2624 = vunpack.c.l.b16 %v2489
    %v2625 = vunpack.c.l.b16 %v2490
    %v2626 = vunpack.c.l.b16 %v2491
    %v2627 = vunpack.c.l.b16 %v2492
    %v2628 = vunpack.c.l.b16 %v2493
    %v2629 = vunpack.c.l.b16 %v2494
    %v2630 = vunpack.c.l.b16 %v2495
    %v2631 = vunpack.c.l.b16 %v2496
    %v2632 = vunpack.c.l.b16 %v2497
    %v2633 = vunpack.c.l.b16 %v2498
    %v2634 = vunpack.c.l.b16 %v2499
    %v2635 = vunpack.c.l.b16 %v2500
    %v2636 = vunpack.c.l.b16 %v2501
    %v2637 = vunpack.c.l.b16 %v2502
    %v2638 = vunpack.c.l.b16 %v2503
    %v2639 = vunpack.c.l.b16 %v2504
    %v2640 = vunpack.c.l.b16 %v2505
    %v2641 = vunpack.c.l.b16 %v2506
    %v2642 = vunpack.c.l.b16 %v2507
    %v2643 = vunpack.c.l.b16 %v2508
    %v2644 = vunpack.c.l.b16 %v2509
    %v2645 = vunpack.c.l.b16 %v2510
    %v2646 = vunpack.c.l.b16 %v2511
    %v2647 = vunpack.c.l.b16 %v2512
    %v2648 = vunpack.c.l.b16 %v2513
    %v2649 = vunpack.c.l.b16 %v2514
    %v2650 = vunpack.c.l.b16 %v2515
    %v2651 = vunpack.c.l.b16 %v2516
    %v2652 = vunpack.c.l.b16 %v2517
    %v2653 = vunpack.c.l.b16 %v2518
    %v2654 = vunpack.c.l.b16 %v2519
    %v2655 = vunpack.c.l.b16 %v2520
    %v2656 = vunpack.c.l.b16 %v2521
    %v2657 = vunpack.c.l.b16 %v2522
    %v2658 = vunpack.c.l.b16 %v2523
    %v2659 = vunpack.c.l.b16 %v2524
    %v2660 = vunpack.c.l.b16 %v2525
    %v2661 = vunpack.c.l.b16 %v2526
    %v2662 = vunpack.c.l.b16 %v2527
    %v2663 = vunpack.c.l.b16 %v2528
    %v2664 = vunpack.c.l.b16 %v2529
    %v2665 = vunpack.c.l.b16 %v2530
    %v2666 = vunpack.c.l.b16 %v2531
    %v2667 = vunpack.c.l.b16 %v2532
    %v2668 = vunpack.c.l.b16 %v2533
    %v2669 = vunpack.c.l.b16 %v2534
    %v2670 = vpack.c.b16 %v2607, %v2606
    %v2671 = vpack.c.b16 %v2609, %v2608
    %v2672 = vpack.c.b16 %v2611, %v2610
    %v2673 = vpack.c.b16 %v2613, %v2612
    %v2674 = vpack.c.b16 %v2615, %v2614
    %v2675 = vpack.c.b16 %v2617, %v2616
    %v2676 = vpack.c.b16 %v2619, %v2618
    %v2677 = vpack.c.b16 %v2621, %v2620
    %v2678 = vpack.c.b16 %v2623, %v2622
    %v2679 = vpack.c.b16 %v2625, %v2624
    %v2680 = vpack.c.b16 %v2627, %v2626
    %v2681 = vpack.c.b16 %v2629, %v2628
    %v2682 = vpack.c.b16 %v2631, %v2630
    %v2683 = vpack.c.b16 %v2633, %v2632
    %v2684 = vpack.c.b16 %v2635, %v2634
    %v2685 = vpack.c.b16 %v2637, %v2636
    %v2686 = vpack.c.b16 %v2639, %v2638
    %v2687 = vpack.c.b16 %v2641, %v2640
    %v2688 = vpack.c.b16 %v2643, %v2642
    %v2689 = vpack.c.b16 %v2645, %v2644
    %v2690 = vpack.c.b16 %v2647, %v2646
    %v2691 = vpack.c.b16 %v2649, %v2648
    %v2692 = vpack.c.b16 %v2651, %v2650
    %v2693 = vpack.c.b16 %v2653, %v2652
    %v2694 = vpack.c.b16 %v2655, %v2654
    %v2695 = vpack.c.b16 %v2657, %v2656
    %v2696 = vpack.c.b16 %v2659, %v2658
    %v2697 = vpack.c.b16 %v2661, %v2660
    %v2698 = vpack.c.b16 %v2663, %v2662
    %v2699 = vpack.c.b16 %v2665, %v2664
    %v2700 = vpack.c.b16 %v2667, %v2666
    %v2701 = vpack.c.b16 %v2669, %v2668
    %2734 = vmatprep.subr.bf16.mxu0 0
    %2735 = vmatpush1.bf16.msra.mxu0 %v2670
    %2736 = vmatprep.subr.bf16.mxu0 0
    %2737 = vmatpush1.bf16.msra.mxu0 %v2671
    %2738 = vmatprep.subr.bf16.mxu0 0
    %2739 = vmatpush1.bf16.msra.mxu0 %v2672
    %2740 = vmatprep.subr.bf16.mxu0 0
    %2741 = vmatpush1.bf16.msra.mxu0 %v2673
    %2742 = vmatprep.subr.bf16.mxu0 0
    %2743 = vmatpush1.bf16.msra.mxu0 %v2674
    %2744 = vmatprep.subr.bf16.mxu0 0
    %2745 = vmatpush1.bf16.msra.mxu0 %v2675
    %2746 = vmatprep.subr.bf16.mxu0 0
    %2747 = vmatpush1.bf16.msra.mxu0 %v2676
    %2748 = vmatprep.subr.bf16.mxu0 0
    %2749 = vmatpush1.bf16.msra.mxu0 %v2677
    %2750 = vmatprep.subr.bf16.mxu0 0
    %2751 = vmatpush1.bf16.msra.mxu0 %v2678
    %2752 = vmatprep.subr.bf16.mxu0 0
    %2753 = vmatpush1.bf16.msra.mxu0 %v2679
    %2754 = vmatprep.subr.bf16.mxu0 0
    %2755 = vmatpush1.bf16.msra.mxu0 %v2680
    %2756 = vmatprep.subr.bf16.mxu0 0
    %2757 = vmatpush1.bf16.msra.mxu0 %v2681
    %2758 = vmatprep.subr.bf16.mxu0 0
    %2759 = vmatpush1.bf16.msra.mxu0 %v2682
    %2760 = vmatprep.subr.bf16.mxu0 0
    %2761 = vmatpush1.bf16.msra.mxu0 %v2683
    %2762 = vmatprep.subr.bf16.mxu0 0
    %2763 = vmatpush1.bf16.msra.mxu0 %v2684
    %2764 = vmatprep.subr.bf16.mxu0 0
    %2765 = vmatpush1.bf16.msra.mxu0 %v2685
    %2766 = vmatprep.mubr.bf16.mxu0 %v2468
    %2767 = vmatmul.mubr.bf16.gmra.mrb[0].mxu0 %v2467
    %v2768 = vpop.f32.mrb[0].mxu0
    %v2769 = vadd.f32 %v2540, %v2768
    %v2770 = vpop.f32.mrb[0].mxu0
    %v2771 = vpop.f32.mrb[0].mxu0
    %v2772 = vpop.f32.mrb[0].mxu0
    %2773 = vdwg.mxu0
    %2774 = vmatprep.subr.bf16.mxu0 0
    %2775 = vmatpush1.bf16.msra.mxu0 %v2686
    %2776 = vmatprep.subr.bf16.mxu0 0
    %2777 = vmatpush1.bf16.msra.mxu0 %v2687
    %2778 = vmatprep.subr.bf16.mxu0 0
    %2779 = vmatpush1.bf16.msra.mxu0 %v2688
    %2780 = vmatprep.subr.bf16.mxu0 0
    %2781 = vmatpush1.bf16.msra.mxu0 %v2689
    %2782 = vmatprep.subr.bf16.mxu0 0
    %2783 = vmatpush1.bf16.msra.mxu0 %v2690
    %2784 = vmatprep.subr.bf16.mxu0 0
    %2785 = vmatpush1.bf16.msra.mxu0 %v2691
    %2786 = vmatprep.subr.bf16.mxu0 0
    %2787 = vmatpush1.bf16.msra.mxu0 %v2692
    %2788 = vmatprep.subr.bf16.mxu0 0
    %2789 = vmatpush1.bf16.msra.mxu0 %v2693
    %2790 = vmatprep.subr.bf16.mxu0 0
    %2791 = vmatpush1.bf16.msra.mxu0 %v2694
    %2792 = vmatprep.subr.bf16.mxu0 0
    %2793 = vmatpush1.bf16.msra.mxu0 %v2695
    %2794 = vmatprep.subr.bf16.mxu0 0
    %2795 = vmatpush1.bf16.msra.mxu0 %v2696
    %2796 = vmatprep.subr.bf16.mxu0 0
    %2797 = vmatpush1.bf16.msra.mxu0 %v2697
    %2798 = vmatprep.subr.bf16.mxu0 0
    %2799 = vmatpush1.bf16.msra.mxu0 %v2698
    %2800 = vmatprep.subr.bf16.mxu0 0
    %2801 = vmatpush1.bf16.msra.mxu0 %v2699
    %2802 = vmatprep.subr.bf16.mxu0 0
    %2803 = vmatpush1.bf16.msra.mxu0 %v2700
    %2804 = vmatprep.subr.bf16.mxu0 0
    %2805 = vmatpush1.bf16.msra.mxu0 %v2701
    %2806 = vmatprep.mubr.bf16.mxu0 %v2470
    %2807 = vmatmul.mubr.bf16.gmra.mrb[0].mxu0 %v2469
    %v2808 = vpop.f32.mrb[0].mxu0
    %v2809 = vadd.f32 %v2769, %v2808
    %v2810 = vpop.f32.mrb[0].mxu0
    %v2811 = vpop.f32.mrb[0].mxu0
    %v2812 = vpop.f32.mrb[0].mxu0
    %2813 = vdwg.mxu0
    %v2814 = vmax.f32 %v2809, 0.0
    %v2815 = vld [vmem:[%s7] sm:$0x1]
    %v2816 = vld [vmem:[#allocation2] sm:$0x1]
    %2818 = vset.pattern.permute.xlu0 0
    %2819 = vperm.xlu0 %2818, %v2816
    %v2820 = vpop.permute.xlu0 %2819
    %v2822 = vlaneseq
    %v2823 = vshrl.u32 %v2822, 7
    %v2824 = vsub.s32 0, %v2823
    %v2825 = vrot.slane %v2820, %v2824
    %2826 = vmatprep.subr.mxu0 0.0
    %2827 = vmatpush1.xpose.msra.mxu0 %v2814
    %2828 = vmatprep.subr.mxu0 0.0
    %2829 = vmatpush1.xpose.msra.mxu0 0.0
    %2830 = vmatprep.subr.mxu0 0.0
    %2831 = vmatpush1.xpose.msra.mxu0 0.0
    %2832 = vmatprep.subr.mxu0 0.0
    %2833 = vmatpush1.xpose.msra.mxu0 0.0
    %2834 = vmatprep.subr.mxu0 0.0
    %2835 = vmatpush1.xpose.msra.mxu0 0.0
    %2836 = vmatprep.subr.mxu0 0.0
    %2837 = vmatpush1.xpose.msra.mxu0 0.0
    %2838 = vmatprep.subr.mxu0 0.0
    %2839 = vmatpush1.xpose.msra.mxu0 0.0
    %2840 = vmatprep.subr.mxu0 0.0
    %2841 = vmatpush1.xpose.msra.mxu0 0.0
    %2842 = vmatprep.subr.mxu0 0.0
    %2843 = vmatpush1.xpose.msra.mxu0 0.0
    %2844 = vmatprep.subr.mxu0 0.0
    %2845 = vmatpush1.xpose.msra.mxu0 0.0
    %2846 = vmatprep.subr.mxu0 0.0
    %2847 = vmatpush1.xpose.msra.mxu0 0.0
    %2848 = vmatprep.subr.mxu0 0.0
    %2849 = vmatpush1.xpose.msra.mxu0 0.0
    %2850 = vmatprep.subr.mxu0 0.0
    %2851 = vmatpush1.xpose.msra.mxu0 0.0
    %2852 = vmatprep.subr.mxu0 0.0
    %2853 = vmatpush1.xpose.msra.mxu0 0.0
    %2854 = vmatprep.subr.mxu0 0.0
    %2855 = vmatpush1.xpose.msra.mxu0 0.0
    %2856 = vmatprep.subr.mxu0 0.0
    %2857 = vmatpush1.xpose.msra.mxu0 0.0
    %2858 = vmatprep.subr.mxu0 0.0
    %2859 = vmatpush1.xpose.msra.mxu0 0.0
    %2860 = vmatprep.subr.mxu0 0.0
    %2861 = vmatpush1.xpose.msra.mxu0 0.0
    %2862 = vmatprep.subr.mxu0 0.0
    %2863 = vmatpush1.xpose.msra.mxu0 0.0
    %2864 = vmatprep.subr.mxu0 0.0
    %2865 = vmatpush1.xpose.msra.mxu0 0.0
    %2866 = vmatprep.subr.mxu0 0.0
    %2867 = vmatpush1.xpose.msra.mxu0 0.0
    %2868 = vmatprep.subr.mxu0 0.0
    %2869 = vmatpush1.xpose.msra.mxu0 0.0
    %2870 = vmatprep.subr.mxu0 0.0
    %2871 = vmatpush1.xpose.msra.mxu0 0.0
    %2872 = vmatprep.subr.mxu0 0.0
    %2873 = vmatpush1.xpose.msra.mxu0 0.0
    %2874 = vmatprep.subr.mxu0 0.0
    %2875 = vmatpush1.xpose.msra.mxu0 0.0
    %2876 = vmatprep.subr.mxu0 0.0
    %2877 = vmatpush1.xpose.msra.mxu0 0.0
    %2878 = vmatprep.subr.mxu0 0.0
    %2879 = vmatpush1.xpose.msra.mxu0 0.0
    %2880 = vmatprep.subr.mxu0 0.0
    %2881 = vmatpush1.xpose.msra.mxu0 0.0
    %2882 = vmatprep.subr.mxu0 0.0
    %2883 = vmatpush1.xpose.msra.mxu0 0.0
    %2884 = vmatprep.subr.mxu0 0.0
    %2885 = vmatpush1.xpose.msra.mxu0 0.0
    %2886 = vmatprep.subr.mxu0 0.0
    %2887 = vmatpush1.xpose.msra.mxu0 0.0
    %2888 = vmatprep.subr.mxu0 0.0
    %2889 = vmatpush1.xpose.msra.mxu0 0.0
    %2890 = vmatprep.mubr.f32.mxu0 0.0
    %2891 = vmatmul.mubr.f32.gmra.mrb[0].mxu0 %v2815
    %v2892 = vpop.f32.mrb[0].mxu0
    %v2893 = vadd.f32 %v2825, %v2892
    %v2894 = vpop.f32.mrb[0].mxu0
    %2895 = vdwg.mxu0
    %vm2896 = vcmask 57344
    %2897 = vst.msk [vmem:[#allocation11] sm:$0x1] %vm2896, %v2893
    // Predicated region
    $region54: #{value_net_forward.1} parent=1 // pred_check
      _
    $region55: #{value_net_forward.1} parent=1 // pred_check_branch
      %2899 = sbr.rel (0) target = $region57
    $region56: #{value_net_forward.1} parent=1 // pred_region
      %s2901 = ssub.s32 16, 16
      %2902 = vsyncadd [#allocation5], %s2901
      %s2904 = sshll.u32 [#allocation11], 4
      %s2905 = int_to_ptr.vmem [resolvable:$true] %s2904
      %2907 = dma.vmem_to_hbm [thread:$0]  %s2905, 16, %s9, [#allocation5]
    $region57: #{value_net_forward.1} parent=1 // pred_fallthru
      _
    // Predicated region
    $region58: #{value_net_forward.1} parent=1 // pred_check
      _
    $region59: #{value_net_forward.1} parent=1 // pred_check_branch
      %2909 = sbr.rel (0) target = $region61
    $region60: #{value_net_forward.1} parent=1 // pred_region
      %2910 = dma.done [#allocation5], 16
    $region61: #{value_net_forward.1} parent=1 // pred_fallthru
      _
    %2911 = vsyncpa [#allocation4], 1
    %2912 = vsyncpa [#allocation7], 1
    %2913 = vsyncpa [#allocation10], 1
    %2914 = vsyncpa [#allocation5], 1

</llo_original>
